<compile_context>
chip_gen: v5e
topology: v5e:2x2
jax: 0.10.0
libtpu: 0.0.40
codegen_flags: <defaults>
</compile_context>

<pallas_src>
import functools
import math

import jax
import jax.numpy as jnp
from jax import lax
from jax.experimental import pallas as pl
from jax.experimental.pallas import tpu as pltpu

EPS = 1e-5        # nn.BatchNorm3d default eps
LANE = 128        # TPU lane width; channel dims padded to multiples of this
VMEM_LIMIT = 32 * 1024 * 1024


def _cdiv(a, b):
    return (a + b - 1) // b


def _round_up(x, n):
    return _cdiv(x, n) * n


def _pick_tile(dim, target):
    """Largest multiple of LANE that divides `dim` and is <= target."""
    assert dim % LANE == 0, dim
    t = max(LANE, min(dim, (target // LANE) * LANE))
    while dim % t:
        t -= LANE
    return t


def _row_tile(mp, target=1024):
    """Largest multiple of 8 that divides `mp` and is <= target."""
    assert mp % 8 == 0, mp
    t = max(8, min(mp, target - target % 8))
    while mp % t:
        t -= 8
    return t


def _pad_vec(v, n):
    return jnp.pad(v, (0, n - v.shape[0]))


# ----------------------------------------------------------------------------
# Pallas kernel 1: tiled matmul (conv-as-matmul, bias-free) + BN-stats epilogue
# ----------------------------------------------------------------------------
def _mm_stats_kernel(a_ref, b_ref, y_ref, st_ref, acc_ref):
    k = pl.program_id(2)

    @pl.when(k == 0)
    def _():
        acc_ref[...] = jnp.zeros_like(acc_ref)

    acc_ref[...] += jnp.dot(a_ref[...], b_ref[...],
                            preferred_element_type=jnp.float32)

    @pl.when(k == pl.num_programs(2) - 1)
    def _():
        y = acc_ref[...]
        y_ref[...] = y
        # Per-channel partial sums for the following training-mode BatchNorm.
        # Padded rows of A are exactly zero (and there is no bias), so they
        # contribute nothing here; the wrapper divides by the true row count.
        s = jnp.sum(y, axis=0, keepdims=True)
        sq = jnp.sum(y * y, axis=0, keepdims=True)
        st_ref[0] = jnp.concatenate([s, sq], axis=0)


def pallas_matmul_stats(a, b):
    """Y = A @ B (f32 MXU accumulation) plus per-row-tile [sum, sumsq] of Y.

    Returns (Y of shape (Mp, N) with Mp = M rounded up to the row tile,
             stats of shape (num_m_tiles, 2, N))."""
    m, kdim = a.shape
    kdim2, ncol = b.shape
    assert kdim == kdim2
    assert kdim % LANE == 0 and ncol % LANE == 0

    tm = min(512, _round_up(m, 8))
    mp = _round_up(m, tm)
    if mp != m:
        a = jnp.pad(a, ((0, mp - m), (0, 0)))
    tn = _pick_tile(ncol, 512)
    tk = _pick_tile(kdim, 1024)
    nm, nn, nk = mp // tm, ncol // tn, kdim // tk

    y, stats = pl.pallas_call(
        _mm_stats_kernel,
        out_shape=(jax.ShapeDtypeStruct((mp, ncol), jnp.float32),
                   jax.ShapeDtypeStruct((nm, 2, ncol), jnp.float32)),
        grid=(nm, nn, nk),
        in_specs=[
            pl.BlockSpec((tm, tk), lambda i, j, s: (i, s)),
            pl.BlockSpec((tk, tn), lambda i, j, s: (s, j)),
        ],
        out_specs=(
            pl.BlockSpec((tm, tn), lambda i, j, s: (i, j)),
            pl.BlockSpec((1, 2, tn), lambda i, j, s: (i, 0, j)),
        ),
        scratch_shapes=[pltpu.VMEM((tm, tn), jnp.float32)],
        compiler_params=pltpu.CompilerParams(
            dimension_semantics=("parallel", "parallel", "arbitrary"),
            vmem_limit_bytes=VMEM_LIMIT),
    )(a, b)
    return y, stats


# ----------------------------------------------------------------------------
# Pallas kernel 2: BN affine (+ optional ReLU) on an already row-padded slab
# ----------------------------------------------------------------------------
def _affine_kernel(x_ref, scale_ref, shift_ref, o_ref, *, relu):
    y = x_ref[...] * scale_ref[...] + shift_ref[...]
    if relu:
        y = jnp.maximum(y, 0.0)
    o_ref[...] = y


def pallas_affine(x, scale, shift, relu):
    mp, c = x.shape
    tm = _row_tile(mp)
    kern = functools.partial(_affine_kernel, relu=relu)
    return pl.pallas_call(
        kern,
        out_shape=jax.ShapeDtypeStruct((mp, c), jnp.float32),
        grid=(mp // tm,),
        in_specs=[
            pl.BlockSpec((tm, c), lambda i: (i, 0)),
            pl.BlockSpec((1, c), lambda i: (0, 0)),
            pl.BlockSpec((1, c), lambda i: (0, 0)),
        ],
        out_specs=pl.BlockSpec((tm, c), lambda i: (i, 0)),
        compiler_params=pltpu.CompilerParams(
            dimension_semantics=("parallel",),
            vmem_limit_bytes=VMEM_LIMIT),
    )(x, scale.reshape(1, c), shift.reshape(1, c))


# ----------------------------------------------------------------------------
# Pallas kernel 3: fused bn2-affine + (downsample-bn affine) + residual + ReLU
# ----------------------------------------------------------------------------
def _bn_add_relu_kernel(r_ref, x_ref, sr_ref, hr_ref, sx_ref, hx_ref, o_ref):
    r = r_ref[...] * sr_ref[...] + hr_ref[...]
    x = x_ref[...] * sx_ref[...] + hx_ref[...]
    o_ref[...] = jnp.maximum(r + x, 0.0)


def pallas_bn_add_relu(res, x, sc_r, sh_r, sc_x, sh_x):
    mp, c = res.shape
    assert x.shape == (mp, c)
    tm = _row_tile(mp)
    return pl.pallas_call(
        _bn_add_relu_kernel,
        out_shape=jax.ShapeDtypeStruct((mp, c), jnp.float32),
        grid=(mp // tm,),
        in_specs=[
            pl.BlockSpec((tm, c), lambda i: (i, 0)),
            pl.BlockSpec((tm, c), lambda i: (i, 0)),
            pl.BlockSpec((1, c), lambda i: (0, 0)),
            pl.BlockSpec((1, c), lambda i: (0, 0)),
            pl.BlockSpec((1, c), lambda i: (0, 0)),
            pl.BlockSpec((1, c), lambda i: (0, 0)),
        ],
        out_specs=pl.BlockSpec((tm, c), lambda i: (i, 0)),
        compiler_params=pltpu.CompilerParams(
            dimension_semantics=("parallel",),
            vmem_limit_bytes=VMEM_LIMIT),
    )(res, x, sc_r.reshape(1, c), sh_r.reshape(1, c),
      sc_x.reshape(1, c), sh_x.reshape(1, c))


# ----------------------------------------------------------------------------
# Tiny plain-JAX glue: fold fused (sum, sumsq) partials into BN scale/shift
# ----------------------------------------------------------------------------
def _bn_scale_shift(stats, m_true, gamma, beta):
    s = jnp.sum(stats, axis=0)                       # (2, C)
    mean = s[0] / m_true
    # clamp guards the E[x^2]-E[x]^2 cancellation from going negative
    var = jnp.maximum(s[1] / m_true - mean * mean, 0.0)
    scale = gamma * lax.rsqrt(var + EPS)
    shift = beta - mean * scale
    return scale, shift
    # TODO(synk): running_mean/running_var buffer updates are training-only
    # state and do not affect the forward output; not modeled.


# ----------------------------------------------------------------------------
# im2col glue (plain JAX) for the (1,k,k) spatial and (k,1,1) temporal convs
# TODO(synk): replace the materialized im2col with implicit convolution inside
# the matmul kernel (tap grid axis + offset index_map) to cut HBM patch traffic.
# ----------------------------------------------------------------------------
def _spatial_patches(x, k, pad, stride):
    # x: (N, T, H, W, C) -> (N*T*Ho*Wo, k*k*C), patch order (dh, dw, c)
    n, t, h, w, c = x.shape
    xp = jnp.pad(x, ((0, 0), (0, 0), (pad, pad), (pad, pad), (0, 0)))
    ho = (h + 2 * pad - k) // stride + 1
    wo = (w + 2 * pad - k) // stride + 1
    cols = []
    for dh in range(k):
        for dw in range(k):
            cols.append(xp[:, :,
                           dh:dh + stride * (ho - 1) + 1:stride,
                           dw:dw + stride * (wo - 1) + 1:stride, :])
    patches = jnp.concatenate(cols, axis=-1)
    return patches.reshape(n * t * ho * wo, k * k * c), (n, t, ho, wo)


def _temporal_patches(x, k, pad, stride):
    # x: (N, T, H, W, C) -> (N*To*H*W, k*C), patch order (dt, c)
    n, t, h, w, c = x.shape
    xp = jnp.pad(x, ((0, 0), (pad, pad), (0, 0), (0, 0), (0, 0)))
    to = (t + 2 * pad - k) // stride + 1
    cols = []
    for dt in range(k):
        cols.append(xp[:, dt:dt + stride * (to - 1) + 1:stride, :, :, :])
    patches = jnp.concatenate(cols, axis=-1)
    return patches.reshape(n * to * h * w, k * c), (n, to, h, w)


# ----------------------------------------------------------------------------
# SpatioTemporalConv: spatial conv -> BN -> ReLU -> temporal conv
# Returns the raw temporal-conv slab + the stats for the BN that follows it,
# so the caller can fuse that BN wherever it is cheapest.
# ----------------------------------------------------------------------------
def stconv_forward(x, p, pad, stride):
    k = p["k"]
    patches, (n, t, ho, wo) = _spatial_patches(x, k, pad, stride)
    m1 = patches.shape[0]
    y, st = pallas_matmul_stats(patches, p["ws_mat"])
    sc, sh = _bn_scale_shift(st, m1, p["bn_gamma_p"], p["bn_beta_p"])
    y = pallas_affine(y, sc, sh, relu=True)
    y5 = y[:m1].reshape(n, t, ho, wo, p["mid_p"])

    patches, (n, to, ho, wo) = _temporal_patches(y5, k, pad, stride)
    m2 = patches.shape[0]
    z, st2 = pallas_matmul_stats(patches, p["wt_mat"])
    return z, st2, m2, (n, to, ho, wo)


def spatio_temporal_res_block(x, params, k, downsample):
    # x: (N, T, H, W, Cin_padded)
    pad = k // 2
    s1 = 2 if downsample else 1

    z1, st1, m1, dims1 = stconv_forward(x, params["conv1"], pad, s1)
    cp_out = z1.shape[-1]
    sc1, sh1 = _bn_scale_shift(st1, m1, params["bn1_gamma_p"], params["bn1_beta_p"])
    r1 = pallas_affine(z1, sc1, sh1, relu=True)
    n, t, h, w = dims1
    r1_5d = r1[:m1].reshape(n, t, h, w, cp_out)

    z2, st2, m2, dims2 = stconv_forward(r1_5d, params["conv2"], pad, 1)
    sc2, sh2 = _bn_scale_shift(st2, m2, params["bn2_gamma_p"], params["bn2_beta_p"])

    if downsample:
        zd, std, md, _ = stconv_forward(x, params["dconv"], 0, 2)
        assert zd.shape == z2.shape and md == m2
        scx, shx = _bn_scale_shift(std, md, params["dbn_gamma_p"], params["dbn_beta_p"])
        x_slab = zd
    else:
        assert x.shape[-1] == cp_out, "residual path requires in_channels == out_channels"
        x_slab = x.reshape(-1, cp_out)
        mp = z2.shape[0]
        if x_slab.shape[0] != mp:
            x_slab = jnp.pad(x_slab, ((0, mp - x_slab.shape[0]), (0, 0)))
        scx = jnp.ones((cp_out,), jnp.float32)
        shx = jnp.zeros((cp_out,), jnp.float32)

    out = pallas_bn_add_relu(z2, x_slab, sc2, sh2, scx, shx)
    n, t, h, w = dims2
    return out[:m2].reshape(n, t, h, w, cp_out)


# ----------------------------------------------------------------------------
# Deterministic parameter construction (shapes match the torch module).
# Conv biases are generated for the reference path but dropped in the Pallas
# path: every conv feeds a training-mode BatchNorm, where they cancel exactly.
# TODO(synk): bf16 weight/activation storage (keeping f32 accumulation) is a
# further HBM-traffic win; kept in f32 here to hold the tight validation bound.
# ----------------------------------------------------------------------------
def init_stconv_params(key, in_ch, out_ch, k):
    kt = kh = kw = k
    mid = max(1, int(math.floor((kt * kh * kw * in_ch * out_ch) /
                                (kh * kw * in_ch + kt * out_ch))))
    ks = jax.random.split(key, 4)
    ws = jax.random.normal(ks[0], (mid, in_ch, 1, kh, kw), jnp.float32) * 0.1
    bs = jax.random.normal(ks[1], (mid,), jnp.float32) * 0.05
    wt = jax.random.normal(ks[2], (out_ch, mid, kt, 1, 1), jnp.float32) * 0.1
    bt = jax.random.normal(ks[3], (out_ch,), jnp.float32) * 0.05

    cin_p = _round_up(in_ch, LANE)
    mid_p = _round_up(mid, LANE)
    cout_p = _round_up(out_ch, LANE)

    ws_t = jnp.transpose(ws[:, :, 0], (2, 3, 1, 0))            # (kh, kw, in, mid)
    ws_t = jnp.pad(ws_t, ((0, 0), (0, 0), (0, cin_p - in_ch), (0, mid_p - mid)))
    wt_t = jnp.transpose(wt[:, :, :, 0, 0], (2, 1, 0))         # (kt, mid, out)
    wt_t = jnp.pad(wt_t, ((0, 0), (0, mid_p - mid), (0, cout_p - out_ch)))

    return {
        "k": k, "mid": mid, "mid_p": mid_p, "cout_p": cout_p,
        "ws": ws, "bs": bs, "wt": wt, "bt": bt,                 # reference weights
        "ws_mat": ws_t.reshape(kh * kw * cin_p, mid_p),         # rows: (dh, dw, c)
        "wt_mat": wt_t.reshape(kt * mid_p, cout_p),             # rows: (dt, c)
        "bn_gamma": jnp.ones((mid,), jnp.float32),
        "bn_beta": jnp.zeros((mid,), jnp.float32),
        "bn_gamma_p": _pad_vec(jnp.ones((mid,), jnp.float32), mid_p),
        "bn_beta_p": jnp.zeros((mid_p,), jnp.float32),
    }


def init_block_params(key, in_ch, out_ch, k, downsample):
    k1, k2, k3 = jax.random.split(key, 3)
    cout_p = _round_up(out_ch, LANE)

    def bn(c, cp):
        return (jnp.ones((c,), jnp.float32), jnp.zeros((c,), jnp.float32),
                _pad_vec(jnp.ones((c,), jnp.float32), cp), jnp.zeros((cp,), jnp.float32))

    p = {"conv1": init_stconv_params(k1, in_ch, out_ch, k),
         "conv2": init_stconv_params(k2, out_ch, out_ch, k)}
    (p["bn1_gamma"], p["bn1_beta"], p["bn1_gamma_p"], p["bn1_beta_p"]) = bn(out_ch, cout_p)
    (p["bn2_gamma"], p["bn2_beta"], p["bn2_gamma_p"], p["bn2_beta_p"]) = bn(out_ch, cout_p)
    if downsample:
        p["dconv"] = init_stconv_params(k3, in_ch, out_ch, 1)
        (p["dbn_gamma"], p["dbn_beta"], p["dbn_gamma_p"], p["dbn_beta_p"]) = bn(out_ch, cout_p)
    return p


# ----------------------------------------------------------------------------
# Pure-JAX reference (NCTHW, lax.conv, with biases) for validation
# ----------------------------------------------------------------------------
def _conv3d_ref(x, w, b, stride, pad):
    y = lax.conv_general_dilated(
        x, w, window_strides=stride,
        padding=[(pad[0], pad[0]), (pad[1], pad[1]), (pad[2], pad[2])],
        dimension_numbers=("NCDHW", "OIDHW", "NCDHW"))
    return y + b[None, :, None, None, None]


def _bn_ref(x, gamma, beta):
    mean = jnp.mean(x, axis=(0, 2, 3, 4), keepdims=True)
    var = jnp.var(x, axis=(0, 2, 3, 4), keepdims=True)  # biased, as torch BN
    xhat = (x - mean) / jnp.sqrt(var + EPS)
    return xhat * gamma[None, :, None, None, None] + beta[None, :, None, None, None]


def _stconv_ref(x, p, pad, stride):
    y = _conv3d_ref(x, p["ws"], p["bs"], (1, stride, stride), (0, pad, pad))
    y = jnp.maximum(_bn_ref(y, p["bn_gamma"], p["bn_beta"]), 0.0)
    return _conv3d_ref(y, p["wt"], p["bt"], (stride, 1, 1), (pad, 0, 0))


def _block_ref(x, params, k, downsample):
    pad = k // 2
    s1 = 2 if downsample else 1
    res = jnp.maximum(_bn_ref(_stconv_ref(x, params["conv1"], pad, s1),
                              params["bn1_gamma"], params["bn1_beta"]), 0.0)
    res = _bn_ref(_stconv_ref(res, params["conv2"], pad, 1),
                  params["bn2_gamma"], params["bn2_beta"])
    if downsample:
        x = _bn_ref(_stconv_ref(x, params["dconv"], 0, 2),
                    params["dbn_gamma"], params["dbn_beta"])
    return jnp.maximum(x + res, 0.0)


# ----------------------------------------------------------------------------
if __name__ == "__main__":
    key = jax.random.PRNGKey(0)

    # (N, Cin, Cout, T, H, W, K, downsample)
    configs = [
        (2, 8, 8, 4, 8, 8, 3, False),
        (2, 8, 16, 4, 8, 8, 3, True),
    ]

    for (n_, cin, cout, t_, h_, w_, k_, ds) in configs:
        kx, kp = jax.random.split(jax.random.fold_in(key, int(ds)))
        x_ncthw = jax.random.normal(kx, (n_, cin, t_, h_, w_), jnp.float32)
        params = init_block_params(kp, cin, cout, k_, ds)

        # Pallas path: channels-last, channel dim zero-padded to a lane multiple
        cin_p = _round_up(cin, LANE)
        x_nthwc = jnp.transpose(x_ncthw, (0, 2, 3, 4, 1))
        x_nthwc = jnp.pad(x_nthwc, ((0, 0),) * 4 + ((0, cin_p - cin),))

        out = spatio_temporal_res_block(x_nthwc, params, k_, ds)
        out = jax.block_until_ready(out)[..., :cout]

        # Validate against pure-JAX reference of the torch forward
        ref = jnp.transpose(_block_ref(x_ncthw, params, k_, ds), (0, 2, 3, 4, 1))
        assert out.shape == ref.shape, (out.shape, ref.shape)
        err = float(jnp.max(jnp.abs(out - ref)))
        assert err < 3e-3, err

    print("KERNEL_OK")
</pallas_src>

<mosaic_0001>
module attributes {stable_mosaic.version = 11 : i64} {
  func.func @_mm_stats_kernel(%arg0: i32, %arg1: i32, %arg2: i32, %arg3: memref<512x384xf32, #tpu.memory_space<vmem>>, %arg4: memref<384x128xf32, #tpu.memory_space<vmem>>, %arg5: memref<512x128xf32, #tpu.memory_space<vmem>>, %arg6: memref<1x2x128xf32, #tpu.memory_space<vmem>>, %arg7: memref<512x128xf32, #tpu.memory_space<vmem>>) attributes {dimension_semantics = [#tpu.dimension_semantics<parallel>, #tpu.dimension_semantics<parallel>, #tpu.dimension_semantics<arbitrary>], iteration_bounds = array<i64: 1, 1, 3>, scalar_prefetch = 0 : i64, scratch_operands = 1 : i64, tpu.core_type = #tpu.core_type<tc>, window_params = [{transform_indices = @transform_0, window_bounds = array<i64: 512, 384>}, {transform_indices = @transform_1, window_bounds = array<i64: 384, 128>}, {transform_indices = @transform_2, window_bounds = array<i64: 512, 128>}, {transform_indices = @transform_3, window_bounds = array<i64: 1, 2, 128>}]} {
    %c0_i32 = arith.constant 0 : i32
    %0 = arith.cmpi eq, %arg2, %c0_i32 : i32
    %1 = arith.extui %0 : i1 to i32
    %c0_i32_0 = arith.constant 0 : i32
    %2 = arith.cmpi ne, %1, %c0_i32_0 : i32
    scf.if %2 {
      %cst_9 = arith.constant 0.000000e+00 : f32
      %12 = vector.broadcast %cst_9 : f32 to vector<512x128xf32>
      %c0_10 = arith.constant 0 : index
      %c0_11 = arith.constant 0 : index
      %13 = vector.load %arg7[%c0_10, %c0_11] : memref<512x128xf32, #tpu.memory_space<vmem>>, vector<512x128xf32>
      tpu.vector_store %arg7[%c0_10, %c0_11], %12 {strides = array<i32>} : memref<512x128xf32, #tpu.memory_space<vmem>>, vector<512x128xf32>,
    } else {
    }
    %c0 = arith.constant 0 : index
    %c0_1 = arith.constant 0 : index
    %3 = vector.load %arg7[%c0, %c0_1] : memref<512x128xf32, #tpu.memory_space<vmem>>, vector<512x128xf32>
    %c0_2 = arith.constant 0 : index
    %c0_3 = arith.constant 0 : index
    %4 = vector.load %arg3[%c0_2, %c0_3] : memref<512x384xf32, #tpu.memory_space<vmem>>, vector<512x384xf32>
    %c0_4 = arith.constant 0 : index
    %c0_5 = arith.constant 0 : index
    %5 = vector.load %arg4[%c0_4, %c0_5] : memref<384x128xf32, #tpu.memory_space<vmem>>, vector<384x128xf32>
    %cst = arith.constant dense<0.000000e+00> : vector<512x128xf32>
    %6 = tpu.matmul %4, %5, %cst {dimension_numbers = #tpu.dot_dimension_numbers<[1], [0], [0], [1], [0, 0, 1, 1], [], []>} : vector<512x384xf32>, vector<384x128xf32>, vector<512x128xf32> -> vector<512x128xf32>
    %7 = arith.addf %3, %6 : vector<512x128xf32>
    %c0_6 = arith.constant 0 : index
    %c0_7 = arith.constant 0 : index
    %8 = vector.load %arg7[%c0_6, %c0_7] : memref<512x128xf32, #tpu.memory_space<vmem>>, vector<512x128xf32>
    tpu.vector_store %arg7[%c0_6, %c0_7], %7 {strides = array<i32>} : memref<512x128xf32, #tpu.memory_space<vmem>>, vector<512x128xf32>,
    %c2_i32 = arith.constant 2 : i32
    %9 = arith.cmpi eq, %arg2, %c2_i32 : i32
    %10 = arith.extui %9 : i1 to i32
    %c0_i32_8 = arith.constant 0 : i32
    %11 = arith.cmpi ne, %10, %c0_i32_8 : i32
    scf.if %11 {
      %c0_9 = arith.constant 0 : index
      %c0_10 = arith.constant 0 : index
      %12 = vector.load %arg7[%c0_9, %c0_10] : memref<512x128xf32, #tpu.memory_space<vmem>>, vector<512x128xf32>
      %c0_11 = arith.constant 0 : index
      %c0_12 = arith.constant 0 : index
      %13 = vector.load %arg5[%c0_11, %c0_12] : memref<512x128xf32, #tpu.memory_space<vmem>>, vector<512x128xf32>
      tpu.vector_store %arg5[%c0_11, %c0_12], %12 {strides = array<i32>} : memref<512x128xf32, #tpu.memory_space<vmem>>, vector<512x128xf32>,
      %cst_13 = arith.constant dense<0.000000e+00> : vector<128xf32>
      %14 = vector.multi_reduction <add>, %12, %cst_13 [0] : vector<512x128xf32> to vector<128xf32>
      %15 = vector.shape_cast %14 : vector<128xf32> to vector<1x128xf32>
      %16 = arith.mulf %12, %12 : vector<512x128xf32>
      %cst_14 = arith.constant dense<0.000000e+00> : vector<128xf32>
      %17 = vector.multi_reduction <add>, %16, %cst_14 [0] : vector<512x128xf32> to vector<128xf32>
      %18 = vector.shape_cast %17 : vector<128xf32> to vector<1x128xf32>
      %19 = tpu.concatenate %15, %18 in 0 : vector<1x128xf32>, vector<1x128xf32> -> vector<2x128xf32>
      %c0_15 = arith.constant 0 : index
      %c0_16 = arith.constant 0 : index
      %c0_17 = arith.constant 0 : index
      %20 = vector.load %arg6[%c0_15, %c0_16, %c0_17] : memref<1x2x128xf32, #tpu.memory_space<vmem>>, vector<1x2x128xf32>
      %21 = vector.shape_cast %20 : vector<1x2x128xf32> to vector<2x128xf32>
      %22 = vector.shape_cast %19 : vector<2x128xf32> to vector<1x2x128xf32>
      tpu.vector_store %arg6[%c0_15, %c0_16, %c0_17], %22 {strides = array<i32>} : memref<1x2x128xf32, #tpu.memory_space<vmem>>, vector<1x2x128xf32>,
    } else {
    }
    return
  }
  func.func @transform_0(%arg0: i32, %arg1: i32, %arg2: i32) -> (i32, i32) {
    %c0_i32 = arith.constant 0 : i32
    return %arg0, %arg2 : i32, i32
  }
  func.func @transform_1(%arg0: i32, %arg1: i32, %arg2: i32) -> (i32, i32) {
    %c0_i32 = arith.constant 0 : i32
    return %arg2, %arg1 : i32, i32
  }
  func.func @transform_2(%arg0: i32, %arg1: i32, %arg2: i32) -> (i32, i32) {
    %c0_i32 = arith.constant 0 : i32
    return %arg0, %arg1 : i32, i32
  }
  func.func @transform_3(%arg0: i32, %arg1: i32, %arg2: i32) -> (i32, i32, i32) {
    %c0_i32 = arith.constant 0 : i32
    %c0_i32_0 = arith.constant 0 : i32
    return %arg0, %c0_i32, %arg1 : i32, i32, i32
  }
}

</mosaic_0001>

<llo_original>
// kernel: tpu_custom_call.1
$region0: #{tpu_custom_call.1}
  #allocation0 [shape = 'u32[]', space=smem, size = 0x4, offset = 0x4, fixed_abs, tag = 'smem constant byte address 0x4 - core index']
  #allocation1 [shape = 'u32[72,128]{1,0:T(1,128)}', space=vmem, size = 0x9000, scoped, tag = 'internal scratch']
  #allocation2 [shape = 'f32[512,128]{1,0:T(8,128)}', space=vmem, size = 0x40000, scoped, tag = 'scratch operand']
  %s0 = inlined_call_operand.hbm [shape: f32[512,1152], index: 0, kind: input, shape index: {}]
  %s1 = inlined_call_operand.hbm [shape: f32[1152,128], index: 1, kind: input, shape index: {}]
  %s2 = inlined_call_operand.hbm [shape: f32[512,128], index: 2, kind: output, shape index: {0}]
  %s3 = inlined_call_operand.hbm [shape: f32[1,2,128], index: 3, kind: output, shape index: {1}]
  %4 = xla_tuple %s2, %s3
  %s5 = sld [smem:[#allocation0]]
  $region65: #{tpu_custom_call.1} parent=0
    _
  %s7 = ssub.s32 1, %s5
  %s8 = scalar_select 0, %s7, %s5
  $region1: #{tpu_custom_call.1} parent=0
    #allocation3 [shape = 'u8[1572864]{0}', space=vmem, size = 0x180000, scoped, tag = 'input window, operand 0']
    #allocation4 [shape = 's32[2]{0}', space=sflag, size = 0x8, scoped, tag = 'scoped memory for tpu_custom_call.1']
    #allocation5 [shape = 's32[2]{0}', space=sflag, size = 0x8, scoped, tag = 'scoped memory for tpu_custom_call.1']
    #allocation6 [shape = 'u8[393216]{0}', space=vmem, size = 0x60000, scoped, tag = 'input window, operand 1']
    #allocation7 [shape = 's32[2]{0}', space=sflag, size = 0x8, scoped, tag = 'scoped memory for tpu_custom_call.1']
    #allocation8 [shape = 'u8[262144]{0}', space=vmem, size = 0x40000, scoped, tag = 'output window, operand 0, single buffered']
    #allocation9 [shape = 'u8[1024]{0}', space=vmem, size = 0x400, scoped, tag = 'output window, operand 1, single buffered']
    #allocation10 [shape = 's32[1]{0}', space=sflag, size = 0x4, scoped, tag = 'scoped memory for tpu_custom_call.1']
    %9 = vsyncpa [#allocation4], 0
    %s10 = scalar_lea.sflag [#allocation4], 1
    %11 = vsyncpa %s10, 0
    %12 = vsyncpa [#allocation7], 0
    %s13 = scalar_lea.sflag [#allocation7], 1
    %14 = vsyncpa %s13, 0
    %15 = vsyncpa [#allocation5], 0
    %16 = vsyncpa [#allocation10], 0
    loop: start=0, step=1, limit=5
    $region2: #{tpu_custom_call.1} parent=1 // loop_pre_header
      _
    $region3: #{tpu_custom_call.1} parent=1 // loop_header
      %s18 = sphi 0, %s22
      %p19 = scmp.ge.s32.totalorder %s18, 5
      %s25 = sphi 0, %s44
      %s26 = sphi 0, %s40
      %s27 = sphi 0, %s36
      %s28 = sphi 0, %s25
      %s29 = sphi 0, %s26
      %s30 = sphi 0, %s27
      %s31 = sphi 0, %s28
      %s32 = sphi 0, %s29
      %s33 = sphi 0, %s30
      %s49 = sphi 0, %s51
      %s52 = sphi 0, %s49
      %s53 = sphi 0, %s52
      %s69 = sphi 0, %s53
      %s77 = sphi 0, %s79
      %s80 = sphi 0, %s77
      %s81 = sphi 0, %s80
      %s97 = sphi 0, %s81
      %s105 = sphi 0, %s107
      %s108 = sphi 0, %s105
      %s109 = sphi 0, %s108
      %s125 = sphi 0, %s109
      %s133 = sphi 0, %s135
      %s136 = sphi 0, %s133
      %s137 = sphi 0, %s136
      %s153 = sphi 0, %s137
    $region4: #{tpu_custom_call.1} parent=1 // loop_header_branch
      %21 = sbr.rel (%p19) target = $region8
    $region5: #{tpu_custom_call.1} parent=1 // loop_body
      %s23 = ssub.s32 %s18, 1
      %s24 = ssub.s32 %s18, 2
      %s34 = sadd.s32 1, %s27
      %p35 = scmp.ge.s32.totalorder %s34, 3
      %s36 = scalar_select %p35, 0, %s34
      %s37 = sadd.s32 1, %s26
      %s38 = scalar_select %p35, %s37, %s26
      %p39 = scmp.ge.s32.totalorder %s38, 1
      %s40 = scalar_select %p39, 0, %s38
      %s41 = sadd.s32 1, %s25
      %s42 = scalar_select %p39, %s41, %s25
      %p43 = scmp.ge.s32.totalorder %s42, 1
      %s44 = scalar_select %p43, 0, %s42
      %s45 = ssub.s32 %s25, %s44
      %s46 = ssub.s32 %s27, %s36
      %s47 = sor.u32 %s45, %s46
      %p48 = scmp.eq.s32.totalorder %s47, 0
      %s50 = sadd.s32 %s49, 1
      %s51 = scalar_select %p48, %s49, %s50
      %p54 = pneg %p48
      %p55 = scmp.eq.s32.totalorder %s18, 2
      %p56 = por %p54, %p55
      %p57 = scmp.ne.s32.totalorder %s49, %s52
      %p58 = scmp.eq.s32.totalorder %s18, 0
      %p59 = por %p57, %p58
      %p60 = scmp.ne.s32.totalorder %s49, %s52
      %p61 = scmp.eq.s32.totalorder %s23, 2
      %p62 = por %p60, %p61
      %p63 = scmp.ne.s32.totalorder %s52, %s53
      %p64 = scmp.eq.s32.totalorder %s23, 0
      %p65 = por %p63, %p64
      %p66 = scmp.ne.s32.totalorder %s52, %s53
      %p67 = scmp.eq.s32.totalorder %s24, 2
      %p68 = por %p66, %p67
      %p70 = scmp.ne.s32.totalorder %s53, %s69
      %p71 = scmp.eq.s32.totalorder %s24, 0
      %p72 = por %p70, %p71
      %s73 = ssub.s32 %s27, %s36
      %s74 = ssub.s32 %s26, %s40
      %s75 = sor.u32 %s73, %s74
      %p76 = scmp.eq.s32.totalorder %s75, 0
      %s78 = sadd.s32 %s77, 1
      %s79 = scalar_select %p76, %s77, %s78
      %p82 = pneg %p76
      %p83 = scmp.eq.s32.totalorder %s18, 2
      %p84 = por %p82, %p83
      %p85 = scmp.ne.s32.totalorder %s77, %s80
      %p86 = scmp.eq.s32.totalorder %s18, 0
      %p87 = por %p85, %p86
      %p88 = scmp.ne.s32.totalorder %s77, %s80
      %p89 = scmp.eq.s32.totalorder %s23, 2
      %p90 = por %p88, %p89
      %p91 = scmp.ne.s32.totalorder %s80, %s81
      %p92 = scmp.eq.s32.totalorder %s23, 0
      %p93 = por %p91, %p92
      %p94 = scmp.ne.s32.totalorder %s80, %s81
      %p95 = scmp.eq.s32.totalorder %s24, 2
      %p96 = por %p94, %p95
      %p98 = scmp.ne.s32.totalorder %s81, %s97
      %p99 = scmp.eq.s32.totalorder %s24, 0
      %p100 = por %p98, %p99
      %s101 = ssub.s32 %s25, %s44
      %s102 = ssub.s32 %s26, %s40
      %s103 = sor.u32 %s101, %s102
      %p104 = scmp.eq.s32.totalorder %s103, 0
      %s106 = sadd.s32 %s105, 1
      %s107 = scalar_select %p104, %s105, %s106
      %p110 = pneg %p104
      %p111 = scmp.eq.s32.totalorder %s18, 2
      %p112 = por %p110, %p111
      %p113 = scmp.ne.s32.totalorder %s105, %s108
      %p114 = scmp.eq.s32.totalorder %s18, 0
      %p115 = por %p113, %p114
      %p116 = scmp.ne.s32.totalorder %s105, %s108
      %p117 = scmp.eq.s32.totalorder %s23, 2
      %p118 = por %p116, %p117
      %p119 = scmp.ne.s32.totalorder %s108, %s109
      %p120 = scmp.eq.s32.totalorder %s23, 0
      %p121 = por %p119, %p120
      %p122 = scmp.ne.s32.totalorder %s108, %s109
      %p123 = scmp.eq.s32.totalorder %s24, 2
      %p124 = por %p122, %p123
      %p126 = scmp.ne.s32.totalorder %s109, %s125
      %p127 = scmp.eq.s32.totalorder %s24, 0
      %p128 = por %p126, %p127
      %s129 = ssub.s32 %s25, %s44
      %s130 = ssub.s32 %s26, %s40
      %s131 = sor.u32 %s129, %s130
      %p132 = scmp.eq.s32.totalorder %s131, 0
      %s134 = sadd.s32 %s133, 1
      %s135 = scalar_select %p132, %s133, %s134
      %p138 = pneg %p132
      %p139 = scmp.eq.s32.totalorder %s18, 2
      %p140 = por %p138, %p139
      %p141 = scmp.ne.s32.totalorder %s133, %s136
      %p142 = scmp.eq.s32.totalorder %s18, 0
      %p143 = por %p141, %p142
      %p144 = scmp.ne.s32.totalorder %s133, %s136
      %p145 = scmp.eq.s32.totalorder %s23, 2
      %p146 = por %p144, %p145
      %p147 = scmp.ne.s32.totalorder %s136, %s137
      %p148 = scmp.eq.s32.totalorder %s23, 0
      %p149 = por %p147, %p148
      %p150 = scmp.ne.s32.totalorder %s136, %s137
      %p151 = scmp.eq.s32.totalorder %s24, 2
      %p152 = por %p150, %p151
      %p154 = scmp.ne.s32.totalorder %s137, %s153
      %p155 = scmp.eq.s32.totalorder %s24, 0
      %p156 = por %p154, %p155
      %p157 = scmp.le.s32.totalorder 1, %s18
      %p158 = scmp.lt.s32.totalorder %s18, 4
      %p159 = pnand %p157, %p158
      %p160 = pneg %p159
      // Predicated region
      $region9: #{tpu_custom_call.1} parent=5 // pred_check
        _
      $region10: #{tpu_custom_call.1} parent=5 // pred_check_branch
        %162 = sbr.rel (%p159) target = $region12
      $region11: #{tpu_custom_call.1} parent=5 // pred_region
        %s163 = ssub.s32 %s18, 1
      $region12: #{tpu_custom_call.1} parent=5 // pred_fallthru
        _
      %p164 = scmp.lt.s32.totalorder %s18, 3
      // Predicated region
      $region13: #{tpu_custom_call.1} parent=5 // pred_check
        %p165 = pneg %p164
      $region14: #{tpu_custom_call.1} parent=5 // pred_check_branch
        %167 = sbr.rel (%p165) target = $region16
      $region15: #{tpu_custom_call.1} parent=5 // pred_region
        // Predicated region
        $region17: #{tpu_custom_call.1} parent=15 // pred_check
          %p168 = pneg %p59
        $region18: #{tpu_custom_call.1} parent=15 // pred_check_branch
          %170 = sbr.rel (%p168) target = $region20
        $region19: #{tpu_custom_call.1} parent=15 // pred_region
          %s171 = sand.u32 %s49, 1
          %s172 = scalar_lea.sflag [#allocation4], %s171
          %s173 = sand.u32 %s49, 1
          %s174 = smul.addr %s173, 1536
          %s175 = scalar_lea.vmem [#allocation3], %s174
          %s176 = smul.u32 64, %s25
          %s177 = smul.u32 3, %s27
          %179 = vsyncadd %s172, 0
          %s180 = smul.addr %s176, 9
          %s181 = sadd.s32 %s177, %s180
          %s182 = smul.addr %s181, 8
          %s183 = scalar_lea.hbm %s0, %s182
          %s184 = sshll.u32 %s183, 4
          %s185 = int_to_ptr.hbm [resolvable:$true] %s184
          %s186 = sshll.u32 %s175, 4
          %s187 = int_to_ptr.vmem [resolvable:$true] %s186
          %192 = dma.hbm_to_vmem [thread:$0]  %s185, 24576, %s187, %s172, 1152, 384, 24
        $region20: #{tpu_custom_call.1} parent=15 // pred_fallthru
          _
        // Predicated region
        $region21: #{tpu_custom_call.1} parent=15 // pred_check
          %p193 = pneg %p87
        $region22: #{tpu_custom_call.1} parent=15 // pred_check_branch
          %195 = sbr.rel (%p193) target = $region24
        $region23: #{tpu_custom_call.1} parent=15 // pred_region
          %s196 = sand.u32 %s77, 1
          %s197 = scalar_lea.sflag [#allocation7], %s196
          %s198 = sand.u32 %s77, 1
          %s199 = smul.addr %s198, 384
          %s200 = scalar_lea.vmem [#allocation6], %s199
          %s201 = smul.u32 48, %s27
          %203 = vsyncadd %s197, 0
          %s204 = sadd.s32 %s26, %s201
          %s205 = smul.addr %s204, 8
          %s206 = scalar_lea.hbm %s1, %s205
          %s207 = sshll.u32 %s206, 4
          %s208 = int_to_ptr.hbm [resolvable:$true] %s207
          %s209 = sshll.u32 %s200, 4
          %s210 = int_to_ptr.vmem [resolvable:$true] %s209
          %215 = dma.hbm_to_vmem [thread:$0]  %s208, 6144, %s210, %s197, 128, 128, 8
        $region24: #{tpu_custom_call.1} parent=15 // pred_fallthru
          _
      $region16: #{tpu_custom_call.1} parent=5 // pred_fallthru
        _
      %p216 = scmp.le.s32.totalorder 1, %s18
      %p217 = scmp.lt.s32.totalorder %s18, 4
      %p218 = pnand %p216, %p217
      %p219 = pneg %p218
      // Predicated region
      $region25: #{tpu_custom_call.1} parent=5 // pred_check
        _
      $region26: #{tpu_custom_call.1} parent=5 // pred_check_branch
        %221 = sbr.rel (%p218) target = $region28
      $region27: #{tpu_custom_call.1} parent=5 // pred_region
        %s222 = ssub.s32 %s18, 1
        %s223 = sand.u32 %s52, 1
        %s224 = scalar_lea.sflag [#allocation4], %s223
        %s225 = sand.u32 %s52, 1
        %s226 = smul.addr %s225, 1536
        %s227 = scalar_lea.vmem [#allocation3], %s226
        // Predicated region
        $region29: #{tpu_custom_call.1} parent=27 // pred_check
          %p228 = pneg %p65
        $region30: #{tpu_custom_call.1} parent=27 // pred_check_branch
          %230 = sbr.rel (%p228) target = $region32
        $region31: #{tpu_custom_call.1} parent=27 // pred_region
          %232 = dma.done %s224, 24576
        $region32: #{tpu_custom_call.1} parent=27 // pred_fallthru
          _
        %s233 = sand.u32 %s80, 1
        %s234 = scalar_lea.sflag [#allocation7], %s233
        %s235 = sand.u32 %s80, 1
        %s236 = smul.addr %s235, 384
        %s237 = scalar_lea.vmem [#allocation6], %s236
        // Predicated region
        $region33: #{tpu_custom_call.1} parent=27 // pred_check
          %p238 = pneg %p93
        $region34: #{tpu_custom_call.1} parent=27 // pred_check_branch
          %240 = sbr.rel (%p238) target = $region36
        $region35: #{tpu_custom_call.1} parent=27 // pred_region
          %242 = dma.done %s234, 6144
        $region36: #{tpu_custom_call.1} parent=27 // pred_fallthru
          _
        %s243 = sand.u32 %s52, 1
        %s244 = scalar_lea.sflag [#allocation4], %s243
        %s245 = sand.u32 %s52, 1
        %s246 = smul.addr %s245, 1536
        %s247 = scalar_lea.vmem [#allocation3], %s246
        %p248 = pneg %p65
        %p249 = pneg %p62
        %s250 = sand.u32 %s80, 1
        %s251 = scalar_lea.sflag [#allocation7], %s250
        %s252 = sand.u32 %s80, 1
        %s253 = smul.addr %s252, 384
        %s254 = scalar_lea.vmem [#allocation6], %s253
        %p255 = pneg %p93
        %p256 = pneg %p90
        %p257 = pneg %p121
        %p258 = pneg %p118
        %p259 = pneg %p149
        %p260 = pneg %p146
        %s261 = smul.u32 64, %s28
        %s262 = smul.u32 3, %s30
        %s263 = smul.u32 48, %s30
        %s264 = smul.u32 64, %s28
        %p265 = scmp.eq.s32.totalorder %s30, 0
        // Predicated region
        $region37: #{tpu_custom_call.1} parent=27 // pred_check
          %p266 = pneg %p265
        $region38: #{tpu_custom_call.1} parent=27 // pred_check_branch
          %268 = sbr.rel (%p266) target = $region40
        $region39: #{tpu_custom_call.1} parent=27 // pred_region
          %269 = vst [vmem:[#allocation2] sm:$0xff] 0.0
          %270 = vst [vmem:[#allocation2 + $0x8] sm:$0xff] 0.0
          %271 = vst [vmem:[#allocation2 + $0x10] sm:$0xff] 0.0
          %272 = vst [vmem:[#allocation2 + $0x18] sm:$0xff] 0.0
          %273 = vst [vmem:[#allocation2 + $0x20] sm:$0xff] 0.0
          %274 = vst [vmem:[#allocation2 + $0x28] sm:$0xff] 0.0
          %275 = vst [vmem:[#allocation2 + $0x30] sm:$0xff] 0.0
          %276 = vst [vmem:[#allocation2 + $0x38] sm:$0xff] 0.0
          %277 = vst [vmem:[#allocation2 + $0x40] sm:$0xff] 0.0
          %278 = vst [vmem:[#allocation2 + $0x48] sm:$0xff] 0.0
          %279 = vst [vmem:[#allocation2 + $0x50] sm:$0xff] 0.0
          %280 = vst [vmem:[#allocation2 + $0x58] sm:$0xff] 0.0
          %281 = vst [vmem:[#allocation2 + $0x60] sm:$0xff] 0.0
          %282 = vst [vmem:[#allocation2 + $0x68] sm:$0xff] 0.0
          %283 = vst [vmem:[#allocation2 + $0x70] sm:$0xff] 0.0
          %284 = vst [vmem:[#allocation2 + $0x78] sm:$0xff] 0.0
          %285 = vst [vmem:[#allocation2 + $0x80] sm:$0xff] 0.0
          %286 = vst [vmem:[#allocation2 + $0x88] sm:$0xff] 0.0
          %287 = vst [vmem:[#allocation2 + $0x90] sm:$0xff] 0.0
          %288 = vst [vmem:[#allocation2 + $0x98] sm:$0xff] 0.0
          %289 = vst [vmem:[#allocation2 + $0xa0] sm:$0xff] 0.0
          %290 = vst [vmem:[#allocation2 + $0xa8] sm:$0xff] 0.0
          %291 = vst [vmem:[#allocation2 + $0xb0] sm:$0xff] 0.0
          %292 = vst [vmem:[#allocation2 + $0xb8] sm:$0xff] 0.0
          %293 = vst [vmem:[#allocation2 + $0xc0] sm:$0xff] 0.0
          %294 = vst [vmem:[#allocation2 + $0xc8] sm:$0xff] 0.0
          %295 = vst [vmem:[#allocation2 + $0xd0] sm:$0xff] 0.0
          %296 = vst [vmem:[#allocation2 + $0xd8] sm:$0xff] 0.0
          %297 = vst [vmem:[#allocation2 + $0xe0] sm:$0xff] 0.0
          %298 = vst [vmem:[#allocation2 + $0xe8] sm:$0xff] 0.0
          %299 = vst [vmem:[#allocation2 + $0xf0] sm:$0xff] 0.0
          %300 = vst [vmem:[#allocation2 + $0xf8] sm:$0xff] 0.0
          %301 = vst [vmem:[#allocation2 + $0x100] sm:$0xff] 0.0
          %302 = vst [vmem:[#allocation2 + $0x108] sm:$0xff] 0.0
          %303 = vst [vmem:[#allocation2 + $0x110] sm:$0xff] 0.0
          %304 = vst [vmem:[#allocation2 + $0x118] sm:$0xff] 0.0
          %305 = vst [vmem:[#allocation2 + $0x120] sm:$0xff] 0.0
          %306 = vst [vmem:[#allocation2 + $0x128] sm:$0xff] 0.0
          %307 = vst [vmem:[#allocation2 + $0x130] sm:$0xff] 0.0
          %308 = vst [vmem:[#allocation2 + $0x138] sm:$0xff] 0.0
          %309 = vst [vmem:[#allocation2 + $0x140] sm:$0xff] 0.0
          %310 = vst [vmem:[#allocation2 + $0x148] sm:$0xff] 0.0
          %311 = vst [vmem:[#allocation2 + $0x150] sm:$0xff] 0.0
          %312 = vst [vmem:[#allocation2 + $0x158] sm:$0xff] 0.0
          %313 = vst [vmem:[#allocation2 + $0x160] sm:$0xff] 0.0
          %314 = vst [vmem:[#allocation2 + $0x168] sm:$0xff] 0.0
          %315 = vst [vmem:[#allocation2 + $0x170] sm:$0xff] 0.0
          %316 = vst [vmem:[#allocation2 + $0x178] sm:$0xff] 0.0
          %317 = vst [vmem:[#allocation2 + $0x180] sm:$0xff] 0.0
          %318 = vst [vmem:[#allocation2 + $0x188] sm:$0xff] 0.0
          %319 = vst [vmem:[#allocation2 + $0x190] sm:$0xff] 0.0
          %320 = vst [vmem:[#allocation2 + $0x198] sm:$0xff] 0.0
          %321 = vst [vmem:[#allocation2 + $0x1a0] sm:$0xff] 0.0
          %322 = vst [vmem:[#allocation2 + $0x1a8] sm:$0xff] 0.0
          %323 = vst [vmem:[#allocation2 + $0x1b0] sm:$0xff] 0.0
          %324 = vst [vmem:[#allocation2 + $0x1b8] sm:$0xff] 0.0
          %325 = vst [vmem:[#allocation2 + $0x1c0] sm:$0xff] 0.0
          %326 = vst [vmem:[#allocation2 + $0x1c8] sm:$0xff] 0.0
          %327 = vst [vmem:[#allocation2 + $0x1d0] sm:$0xff] 0.0
          %328 = vst [vmem:[#allocation2 + $0x1d8] sm:$0xff] 0.0
          %329 = vst [vmem:[#allocation2 + $0x1e0] sm:$0xff] 0.0
          %330 = vst [vmem:[#allocation2 + $0x1e8] sm:$0xff] 0.0
          %331 = vst [vmem:[#allocation2 + $0x1f0] sm:$0xff] 0.0
          %332 = vst [vmem:[#allocation2 + $0x1f8] sm:$0xff] 0.0
        $region40: #{tpu_custom_call.1} parent=27 // pred_fallthru
          _
        %v333 = vld [vmem:[#allocation2] sm:$0xff]
        %v334 = vld [vmem:[#allocation2 + $0x8] sm:$0xff]
        %v335 = vld [vmem:[#allocation2 + $0x10] sm:$0xff]
        %v336 = vld [vmem:[#allocation2 + $0x18] sm:$0xff]
        %v337 = vld [vmem:[#allocation2 + $0x20] sm:$0xff]
        %v338 = vld [vmem:[#allocation2 + $0x28] sm:$0xff]
        %v339 = vld [vmem:[#allocation2 + $0x30] sm:$0xff]
        %v340 = vld [vmem:[#allocation2 + $0x38] sm:$0xff]
        %v341 = vld [vmem:[#allocation2 + $0x40] sm:$0xff]
        %v342 = vld [vmem:[#allocation2 + $0x48] sm:$0xff]
        %v343 = vld [vmem:[#allocation2 + $0x50] sm:$0xff]
        %v344 = vld [vmem:[#allocation2 + $0x58] sm:$0xff]
        %v345 = vld [vmem:[#allocation2 + $0x60] sm:$0xff]
        %v346 = vld [vmem:[#allocation2 + $0x68] sm:$0xff]
        %v347 = vld [vmem:[#allocation2 + $0x70] sm:$0xff]
        %v348 = vld [vmem:[#allocation2 + $0x78] sm:$0xff]
        %v349 = vld [vmem:[#allocation2 + $0x80] sm:$0xff]
        %v350 = vld [vmem:[#allocation2 + $0x88] sm:$0xff]
        %v351 = vld [vmem:[#allocation2 + $0x90] sm:$0xff]
        %v352 = vld [vmem:[#allocation2 + $0x98] sm:$0xff]
        %v353 = vld [vmem:[#allocation2 + $0xa0] sm:$0xff]
        %v354 = vld [vmem:[#allocation2 + $0xa8] sm:$0xff]
        %v355 = vld [vmem:[#allocation2 + $0xb0] sm:$0xff]
        %v356 = vld [vmem:[#allocation2 + $0xb8] sm:$0xff]
        %v357 = vld [vmem:[#allocation2 + $0xc0] sm:$0xff]
        %v358 = vld [vmem:[#allocation2 + $0xc8] sm:$0xff]
        %v359 = vld [vmem:[#allocation2 + $0xd0] sm:$0xff]
        %v360 = vld [vmem:[#allocation2 + $0xd8] sm:$0xff]
        %v361 = vld [vmem:[#allocation2 + $0xe0] sm:$0xff]
        %v362 = vld [vmem:[#allocation2 + $0xe8] sm:$0xff]
        %v363 = vld [vmem:[#allocation2 + $0xf0] sm:$0xff]
        %v364 = vld [vmem:[#allocation2 + $0xf8] sm:$0xff]
        %v365 = vld [vmem:[#allocation2 + $0x100] sm:$0xff]
        %v366 = vld [vmem:[#allocation2 + $0x108] sm:$0xff]
        %v367 = vld [vmem:[#allocation2 + $0x110] sm:$0xff]
        %v368 = vld [vmem:[#allocation2 + $0x118] sm:$0xff]
        %v369 = vld [vmem:[#allocation2 + $0x120] sm:$0xff]
        %v370 = vld [vmem:[#allocation2 + $0x128] sm:$0xff]
        %v371 = vld [vmem:[#allocation2 + $0x130] sm:$0xff]
        %v372 = vld [vmem:[#allocation2 + $0x138] sm:$0xff]
        %v373 = vld [vmem:[#allocation2 + $0x140] sm:$0xff]
        %v374 = vld [vmem:[#allocation2 + $0x148] sm:$0xff]
        %v375 = vld [vmem:[#allocation2 + $0x150] sm:$0xff]
        %v376 = vld [vmem:[#allocation2 + $0x158] sm:$0xff]
        %v377 = vld [vmem:[#allocation2 + $0x160] sm:$0xff]
        %v378 = vld [vmem:[#allocation2 + $0x168] sm:$0xff]
        %v379 = vld [vmem:[#allocation2 + $0x170] sm:$0xff]
        %v380 = vld [vmem:[#allocation2 + $0x178] sm:$0xff]
        %v381 = vld [vmem:[#allocation2 + $0x180] sm:$0xff]
        %v382 = vld [vmem:[#allocation2 + $0x188] sm:$0xff]
        %v383 = vld [vmem:[#allocation2 + $0x190] sm:$0xff]
        %v384 = vld [vmem:[#allocation2 + $0x198] sm:$0xff]
        %v385 = vld [vmem:[#allocation2 + $0x1a0] sm:$0xff]
        %v386 = vld [vmem:[#allocation2 + $0x1a8] sm:$0xff]
        %v387 = vld [vmem:[#allocation2 + $0x1b0] sm:$0xff]
        %v388 = vld [vmem:[#allocation2 + $0x1b8] sm:$0xff]
        %v389 = vld [vmem:[#allocation2 + $0x1c0] sm:$0xff]
        %v390 = vld [vmem:[#allocation2 + $0x1c8] sm:$0xff]
        %v391 = vld [vmem:[#allocation2 + $0x1d0] sm:$0xff]
        %v392 = vld [vmem:[#allocation2 + $0x1d8] sm:$0xff]
        %v393 = vld [vmem:[#allocation2 + $0x1e0] sm:$0xff]
        %v394 = vld [vmem:[#allocation2 + $0x1e8] sm:$0xff]
        %v395 = vld [vmem:[#allocation2 + $0x1f0] sm:$0xff]
        %v396 = vld [vmem:[#allocation2 + $0x1f8] sm:$0xff]
        %v397 = vld [vmem:[%s227] sm:$0xff]
        %v398 = vld [vmem:[%s227 + $0x8] sm:$0xff]
        %v399 = vld [vmem:[%s227 + $0x10] sm:$0xff]
        %v400 = vld [vmem:[%s227 + $0x18] sm:$0xff]
        %v401 = vld [vmem:[%s227 + $0x20] sm:$0xff]
        %v402 = vld [vmem:[%s227 + $0x28] sm:$0xff]
        %v403 = vld [vmem:[%s227 + $0x30] sm:$0xff]
        %v404 = vld [vmem:[%s227 + $0x38] sm:$0xff]
        %v405 = vld [vmem:[%s227 + $0x40] sm:$0xff]
        %v406 = vld [vmem:[%s227 + $0x48] sm:$0xff]
        %v407 = vld [vmem:[%s227 + $0x50] sm:$0xff]
        %v408 = vld [vmem:[%s227 + $0x58] sm:$0xff]
        %v409 = vld [vmem:[%s227 + $0x60] sm:$0xff]
        %v410 = vld [vmem:[%s227 + $0x68] sm:$0xff]
        %v411 = vld [vmem:[%s227 + $0x70] sm:$0xff]
        %v412 = vld [vmem:[%s227 + $0x78] sm:$0xff]
        %v413 = vld [vmem:[%s227 + $0x80] sm:$0xff]
        %v414 = vld [vmem:[%s227 + $0x88] sm:$0xff]
        %v415 = vld [vmem:[%s227 + $0x90] sm:$0xff]
        %v416 = vld [vmem:[%s227 + $0x98] sm:$0xff]
        %v417 = vld [vmem:[%s227 + $0xa0] sm:$0xff]
        %v418 = vld [vmem:[%s227 + $0xa8] sm:$0xff]
        %v419 = vld [vmem:[%s227 + $0xb0] sm:$0xff]
        %v420 = vld [vmem:[%s227 + $0xb8] sm:$0xff]
        %v421 = vld [vmem:[%s227 + $0xc0] sm:$0xff]
        %v422 = vld [vmem:[%s227 + $0xc8] sm:$0xff]
        %v423 = vld [vmem:[%s227 + $0xd0] sm:$0xff]
        %v424 = vld [vmem:[%s227 + $0xd8] sm:$0xff]
        %v425 = vld [vmem:[%s227 + $0xe0] sm:$0xff]
        %v426 = vld [vmem:[%s227 + $0xe8] sm:$0xff]
        %v427 = vld [vmem:[%s227 + $0xf0] sm:$0xff]
        %v428 = vld [vmem:[%s227 + $0xf8] sm:$0xff]
        %v429 = vld [vmem:[%s227 + $0x100] sm:$0xff]
        %v430 = vld [vmem:[%s227 + $0x108] sm:$0xff]
        %v431 = vld [vmem:[%s227 + $0x110] sm:$0xff]
        %v432 = vld [vmem:[%s227 + $0x118] sm:$0xff]
        %v433 = vld [vmem:[%s227 + $0x120] sm:$0xff]
        %v434 = vld [vmem:[%s227 + $0x128] sm:$0xff]
        %v435 = vld [vmem:[%s227 + $0x130] sm:$0xff]
        %v436 = vld [vmem:[%s227 + $0x138] sm:$0xff]
        %v437 = vld [vmem:[%s227 + $0x140] sm:$0xff]
        %v438 = vld [vmem:[%s227 + $0x148] sm:$0xff]
        %v439 = vld [vmem:[%s227 + $0x150] sm:$0xff]
        %v440 = vld [vmem:[%s227 + $0x158] sm:$0xff]
        %v441 = vld [vmem:[%s227 + $0x160] sm:$0xff]
        %v442 = vld [vmem:[%s227 + $0x168] sm:$0xff]
        %v443 = vld [vmem:[%s227 + $0x170] sm:$0xff]
        %v444 = vld [vmem:[%s227 + $0x178] sm:$0xff]
        %v445 = vld [vmem:[%s227 + $0x180] sm:$0xff]
        %v446 = vld [vmem:[%s227 + $0x188] sm:$0xff]
        %v447 = vld [vmem:[%s227 + $0x190] sm:$0xff]
        %v448 = vld [vmem:[%s227 + $0x198] sm:$0xff]
        %v449 = vld [vmem:[%s227 + $0x1a0] sm:$0xff]
        %v450 = vld [vmem:[%s227 + $0x1a8] sm:$0xff]
        %v451 = vld [vmem:[%s227 + $0x1b0] sm:$0xff]
        %v452 = vld [vmem:[%s227 + $0x1b8] sm:$0xff]
        %v453 = vld [vmem:[%s227 + $0x1c0] sm:$0xff]
        %v454 = vld [vmem:[%s227 + $0x1c8] sm:$0xff]
        %v455 = vld [vmem:[%s227 + $0x1d0] sm:$0xff]
        %v456 = vld [vmem:[%s227 + $0x1d8] sm:$0xff]
        %v457 = vld [vmem:[%s227 + $0x1e0] sm:$0xff]
        %v458 = vld [vmem:[%s227 + $0x1e8] sm:$0xff]
        %v459 = vld [vmem:[%s227 + $0x1f0] sm:$0xff]
        %v460 = vld [vmem:[%s227 + $0x1f8] sm:$0xff]
        %v461 = vld [vmem:[%s227 + $0x200] sm:$0xff]
        %v462 = vld [vmem:[%s227 + $0x208] sm:$0xff]
        %v463 = vld [vmem:[%s227 + $0x210] sm:$0xff]
        %v464 = vld [vmem:[%s227 + $0x218] sm:$0xff]
        %v465 = vld [vmem:[%s227 + $0x220] sm:$0xff]
        %v466 = vld [vmem:[%s227 + $0x228] sm:$0xff]
        %v467 = vld [vmem:[%s227 + $0x230] sm:$0xff]
        %v468 = vld [vmem:[%s227 + $0x238] sm:$0xff]
        %v469 = vld [vmem:[%s227 + $0x240] sm:$0xff]
        %v470 = vld [vmem:[%s227 + $0x248] sm:$0xff]
        %v471 = vld [vmem:[%s227 + $0x250] sm:$0xff]
        %v472 = vld [vmem:[%s227 + $0x258] sm:$0xff]
        %v473 = vld [vmem:[%s227 + $0x260] sm:$0xff]
        %v474 = vld [vmem:[%s227 + $0x268] sm:$0xff]
        %v475 = vld [vmem:[%s227 + $0x270] sm:$0xff]
        %v476 = vld [vmem:[%s227 + $0x278] sm:$0xff]
        %v477 = vld [vmem:[%s227 + $0x280] sm:$0xff]
        %v478 = vld [vmem:[%s227 + $0x288] sm:$0xff]
        %v479 = vld [vmem:[%s227 + $0x290] sm:$0xff]
        %v480 = vld [vmem:[%s227 + $0x298] sm:$0xff]
        %v481 = vld [vmem:[%s227 + $0x2a0] sm:$0xff]
        %v482 = vld [vmem:[%s227 + $0x2a8] sm:$0xff]
        %v483 = vld [vmem:[%s227 + $0x2b0] sm:$0xff]
        %v484 = vld [vmem:[%s227 + $0x2b8] sm:$0xff]
        %v485 = vld [vmem:[%s227 + $0x2c0] sm:$0xff]
        %v486 = vld [vmem:[%s227 + $0x2c8] sm:$0xff]
        %v487 = vld [vmem:[%s227 + $0x2d0] sm:$0xff]
        %v488 = vld [vmem:[%s227 + $0x2d8] sm:$0xff]
        %v489 = vld [vmem:[%s227 + $0x2e0] sm:$0xff]
        %v490 = vld [vmem:[%s227 + $0x2e8] sm:$0xff]
        %v491 = vld [vmem:[%s227 + $0x2f0] sm:$0xff]
        %v492 = vld [vmem:[%s227 + $0x2f8] sm:$0xff]
        %v493 = vld [vmem:[%s227 + $0x300] sm:$0xff]
        %v494 = vld [vmem:[%s227 + $0x308] sm:$0xff]
        %v495 = vld [vmem:[%s227 + $0x310] sm:$0xff]
        %v496 = vld [vmem:[%s227 + $0x318] sm:$0xff]
        %v497 = vld [vmem:[%s227 + $0x320] sm:$0xff]
        %v498 = vld [vmem:[%s227 + $0x328] sm:$0xff]
        %v499 = vld [vmem:[%s227 + $0x330] sm:$0xff]
        %v500 = vld [vmem:[%s227 + $0x338] sm:$0xff]
        %v501 = vld [vmem:[%s227 + $0x340] sm:$0xff]
        %v502 = vld [vmem:[%s227 + $0x348] sm:$0xff]
        %v503 = vld [vmem:[%s227 + $0x350] sm:$0xff]
        %v504 = vld [vmem:[%s227 + $0x358] sm:$0xff]
        %v505 = vld [vmem:[%s227 + $0x360] sm:$0xff]
        %v506 = vld [vmem:[%s227 + $0x368] sm:$0xff]
        %v507 = vld [vmem:[%s227 + $0x370] sm:$0xff]
        %v508 = vld [vmem:[%s227 + $0x378] sm:$0xff]
        %v509 = vld [vmem:[%s227 + $0x380] sm:$0xff]
        %v510 = vld [vmem:[%s227 + $0x388] sm:$0xff]
        %v511 = vld [vmem:[%s227 + $0x390] sm:$0xff]
        %v512 = vld [vmem:[%s227 + $0x398] sm:$0xff]
        %v513 = vld [vmem:[%s227 + $0x3a0] sm:$0xff]
        %v514 = vld [vmem:[%s227 + $0x3a8] sm:$0xff]
        %v515 = vld [vmem:[%s227 + $0x3b0] sm:$0xff]
        %v516 = vld [vmem:[%s227 + $0x3b8] sm:$0xff]
        %v517 = vld [vmem:[%s227 + $0x3c0] sm:$0xff]
        %v518 = vld [vmem:[%s227 + $0x3c8] sm:$0xff]
        %v519 = vld [vmem:[%s227 + $0x3d0] sm:$0xff]
        %v520 = vld [vmem:[%s227 + $0x3d8] sm:$0xff]
        %v521 = vld [vmem:[%s227 + $0x3e0] sm:$0xff]
        %v522 = vld [vmem:[%s227 + $0x3e8] sm:$0xff]
        %v523 = vld [vmem:[%s227 + $0x3f0] sm:$0xff]
        %v524 = vld [vmem:[%s227 + $0x3f8] sm:$0xff]
        %v525 = vld [vmem:[%s227 + $0x400] sm:$0xff]
        %v526 = vld [vmem:[%s227 + $0x408] sm:$0xff]
        %v527 = vld [vmem:[%s227 + $0x410] sm:$0xff]
        %v528 = vld [vmem:[%s227 + $0x418] sm:$0xff]
        %v529 = vld [vmem:[%s227 + $0x420] sm:$0xff]
        %v530 = vld [vmem:[%s227 + $0x428] sm:$0xff]
        %v531 = vld [vmem:[%s227 + $0x430] sm:$0xff]
        %v532 = vld [vmem:[%s227 + $0x438] sm:$0xff]
        %v533 = vld [vmem:[%s227 + $0x440] sm:$0xff]
        %v534 = vld [vmem:[%s227 + $0x448] sm:$0xff]
        %v535 = vld [vmem:[%s227 + $0x450] sm:$0xff]
        %v536 = vld [vmem:[%s227 + $0x458] sm:$0xff]
        %v537 = vld [vmem:[%s227 + $0x460] sm:$0xff]
        %v538 = vld [vmem:[%s227 + $0x468] sm:$0xff]
        %v539 = vld [vmem:[%s227 + $0x470] sm:$0xff]
        %v540 = vld [vmem:[%s227 + $0x478] sm:$0xff]
        %v541 = vld [vmem:[%s227 + $0x480] sm:$0xff]
        %v542 = vld [vmem:[%s227 + $0x488] sm:$0xff]
        %v543 = vld [vmem:[%s227 + $0x490] sm:$0xff]
        %v544 = vld [vmem:[%s227 + $0x498] sm:$0xff]
        %v545 = vld [vmem:[%s227 + $0x4a0] sm:$0xff]
        %v546 = vld [vmem:[%s227 + $0x4a8] sm:$0xff]
        %v547 = vld [vmem:[%s227 + $0x4b0] sm:$0xff]
        %v548 = vld [vmem:[%s227 + $0x4b8] sm:$0xff]
        %v549 = vld [vmem:[%s227 + $0x4c0] sm:$0xff]
        %v550 = vld [vmem:[%s227 + $0x4c8] sm:$0xff]
        %v551 = vld [vmem:[%s227 + $0x4d0] sm:$0xff]
        %v552 = vld [vmem:[%s227 + $0x4d8] sm:$0xff]
        %v553 = vld [vmem:[%s227 + $0x4e0] sm:$0xff]
        %v554 = vld [vmem:[%s227 + $0x4e8] sm:$0xff]
        %v555 = vld [vmem:[%s227 + $0x4f0] sm:$0xff]
        %v556 = vld [vmem:[%s227 + $0x4f8] sm:$0xff]
        %v557 = vld [vmem:[%s227 + $0x500] sm:$0xff]
        %v558 = vld [vmem:[%s227 + $0x508] sm:$0xff]
        %v559 = vld [vmem:[%s227 + $0x510] sm:$0xff]
        %v560 = vld [vmem:[%s227 + $0x518] sm:$0xff]
        %v561 = vld [vmem:[%s227 + $0x520] sm:$0xff]
        %v562 = vld [vmem:[%s227 + $0x528] sm:$0xff]
        %v563 = vld [vmem:[%s227 + $0x530] sm:$0xff]
        %v564 = vld [vmem:[%s227 + $0x538] sm:$0xff]
        %v565 = vld [vmem:[%s227 + $0x540] sm:$0xff]
        %v566 = vld [vmem:[%s227 + $0x548] sm:$0xff]
        %v567 = vld [vmem:[%s227 + $0x550] sm:$0xff]
        %v568 = vld [vmem:[%s227 + $0x558] sm:$0xff]
        %v569 = vld [vmem:[%s227 + $0x560] sm:$0xff]
        %v570 = vld [vmem:[%s227 + $0x568] sm:$0xff]
        %v571 = vld [vmem:[%s227 + $0x570] sm:$0xff]
        %v572 = vld [vmem:[%s227 + $0x578] sm:$0xff]
        %v573 = vld [vmem:[%s227 + $0x580] sm:$0xff]
        %v574 = vld [vmem:[%s227 + $0x588] sm:$0xff]
        %v575 = vld [vmem:[%s227 + $0x590] sm:$0xff]
        %v576 = vld [vmem:[%s227 + $0x598] sm:$0xff]
        %v577 = vld [vmem:[%s227 + $0x5a0] sm:$0xff]
        %v578 = vld [vmem:[%s227 + $0x5a8] sm:$0xff]
        %v579 = vld [vmem:[%s227 + $0x5b0] sm:$0xff]
        %v580 = vld [vmem:[%s227 + $0x5b8] sm:$0xff]
        %v581 = vld [vmem:[%s227 + $0x5c0] sm:$0xff]
        %v582 = vld [vmem:[%s227 + $0x5c8] sm:$0xff]
        %v583 = vld [vmem:[%s227 + $0x5d0] sm:$0xff]
        %v584 = vld [vmem:[%s227 + $0x5d8] sm:$0xff]
        %v585 = vld [vmem:[%s227 + $0x5e0] sm:$0xff]
        %v586 = vld [vmem:[%s227 + $0x5e8] sm:$0xff]
        %v587 = vld [vmem:[%s227 + $0x5f0] sm:$0xff]
        %v588 = vld [vmem:[%s227 + $0x5f8] sm:$0xff]
        %v589 = vld [vmem:[%s237] sm:$0xff]
        %v590 = vld [vmem:[%s237 + $0x8] sm:$0xff]
        %v591 = vld [vmem:[%s237 + $0x10] sm:$0xff]
        %v592 = vld [vmem:[%s237 + $0x18] sm:$0xff]
        %v593 = vld [vmem:[%s237 + $0x20] sm:$0xff]
        %v594 = vld [vmem:[%s237 + $0x28] sm:$0xff]
        %v595 = vld [vmem:[%s237 + $0x30] sm:$0xff]
        %v596 = vld [vmem:[%s237 + $0x38] sm:$0xff]
        %v597 = vld [vmem:[%s237 + $0x40] sm:$0xff]
        %v598 = vld [vmem:[%s237 + $0x48] sm:$0xff]
        %v599 = vld [vmem:[%s237 + $0x50] sm:$0xff]
        %v600 = vld [vmem:[%s237 + $0x58] sm:$0xff]
        %v601 = vld [vmem:[%s237 + $0x60] sm:$0xff]
        %v602 = vld [vmem:[%s237 + $0x68] sm:$0xff]
        %v603 = vld [vmem:[%s237 + $0x70] sm:$0xff]
        %v604 = vld [vmem:[%s237 + $0x78] sm:$0xff]
        %v605 = vld [vmem:[%s237 + $0x80] sm:$0xff]
        %v606 = vld [vmem:[%s237 + $0x88] sm:$0xff]
        %v607 = vld [vmem:[%s237 + $0x90] sm:$0xff]
        %v608 = vld [vmem:[%s237 + $0x98] sm:$0xff]
        %v609 = vld [vmem:[%s237 + $0xa0] sm:$0xff]
        %v610 = vld [vmem:[%s237 + $0xa8] sm:$0xff]
        %v611 = vld [vmem:[%s237 + $0xb0] sm:$0xff]
        %v612 = vld [vmem:[%s237 + $0xb8] sm:$0xff]
        %v613 = vld [vmem:[%s237 + $0xc0] sm:$0xff]
        %v614 = vld [vmem:[%s237 + $0xc8] sm:$0xff]
        %v615 = vld [vmem:[%s237 + $0xd0] sm:$0xff]
        %v616 = vld [vmem:[%s237 + $0xd8] sm:$0xff]
        %v617 = vld [vmem:[%s237 + $0xe0] sm:$0xff]
        %v618 = vld [vmem:[%s237 + $0xe8] sm:$0xff]
        %v619 = vld [vmem:[%s237 + $0xf0] sm:$0xff]
        %v620 = vld [vmem:[%s237 + $0xf8] sm:$0xff]
        %v621 = vld [vmem:[%s237 + $0x100] sm:$0xff]
        %v622 = vld [vmem:[%s237 + $0x108] sm:$0xff]
        %v623 = vld [vmem:[%s237 + $0x110] sm:$0xff]
        %v624 = vld [vmem:[%s237 + $0x118] sm:$0xff]
        %v625 = vld [vmem:[%s237 + $0x120] sm:$0xff]
        %v626 = vld [vmem:[%s237 + $0x128] sm:$0xff]
        %v627 = vld [vmem:[%s237 + $0x130] sm:$0xff]
        %v628 = vld [vmem:[%s237 + $0x138] sm:$0xff]
        %v629 = vld [vmem:[%s237 + $0x140] sm:$0xff]
        %v630 = vld [vmem:[%s237 + $0x148] sm:$0xff]
        %v631 = vld [vmem:[%s237 + $0x150] sm:$0xff]
        %v632 = vld [vmem:[%s237 + $0x158] sm:$0xff]
        %v633 = vld [vmem:[%s237 + $0x160] sm:$0xff]
        %v634 = vld [vmem:[%s237 + $0x168] sm:$0xff]
        %v635 = vld [vmem:[%s237 + $0x170] sm:$0xff]
        %v636 = vld [vmem:[%s237 + $0x178] sm:$0xff]
        %637 = vmatpush.msra.mxu0 %v604
        %638 = vmatpush.msra.mxu0 %v603
        %639 = vmatpush.msra.mxu0 %v602
        %640 = vmatpush.msra.mxu0 %v601
        %641 = vmatpush.msra.mxu0 %v600
        %642 = vmatpush.msra.mxu0 %v599
        %643 = vmatpush.msra.mxu0 %v598
        %644 = vmatpush.msra.mxu0 %v597
        %645 = vmatpush.msra.mxu0 %v596
        %646 = vmatpush.msra.mxu0 %v595
        %647 = vmatpush.msra.mxu0 %v594
        %648 = vmatpush.msra.mxu0 %v593
        %649 = vmatpush.msra.mxu0 %v592
        %650 = vmatpush.msra.mxu0 %v591
        %651 = vmatpush.msra.mxu0 %v590
        %652 = vmatpush.msra.mxu0 %v589
        %653 = vmatmul.f32.gmra.mxu0 %v397
        %v654 = vpop.f32.mrf.mxu0
        %v655 = vadd.f32 0.0, %v654
        %656 = vmatmul.f32.gmra.mxu0 %v400
        %v657 = vpop.f32.mrf.mxu0
        %v658 = vadd.f32 0.0, %v657
        %659 = vmatmul.f32.gmra.mxu0 %v403
        %v660 = vpop.f32.mrf.mxu0
        %v661 = vadd.f32 0.0, %v660
        %662 = vmatmul.f32.gmra.mxu0 %v406
        %v663 = vpop.f32.mrf.mxu0
        %v664 = vadd.f32 0.0, %v663
        %665 = vmatmul.f32.gmra.mxu0 %v409
        %v666 = vpop.f32.mrf.mxu0
        %v667 = vadd.f32 0.0, %v666
        %668 = vmatmul.f32.gmra.mxu0 %v412
        %v669 = vpop.f32.mrf.mxu0
        %v670 = vadd.f32 0.0, %v669
        %671 = vmatmul.f32.gmra.mxu0 %v415
        %v672 = vpop.f32.mrf.mxu0
        %v673 = vadd.f32 0.0, %v672
        %674 = vmatmul.f32.gmra.mxu0 %v418
        %v675 = vpop.f32.mrf.mxu0
        %v676 = vadd.f32 0.0, %v675
        %677 = vmatmul.f32.gmra.mxu0 %v421
        %v678 = vpop.f32.mrf.mxu0
        %v679 = vadd.f32 0.0, %v678
        %680 = vmatmul.f32.gmra.mxu0 %v424
        %v681 = vpop.f32.mrf.mxu0
        %v682 = vadd.f32 0.0, %v681
        %683 = vmatmul.f32.gmra.mxu0 %v427
        %v684 = vpop.f32.mrf.mxu0
        %v685 = vadd.f32 0.0, %v684
        %686 = vmatmul.f32.gmra.mxu0 %v430
        %v687 = vpop.f32.mrf.mxu0
        %v688 = vadd.f32 0.0, %v687
        %689 = vmatmul.f32.gmra.mxu0 %v433
        %v690 = vpop.f32.mrf.mxu0
        %v691 = vadd.f32 0.0, %v690
        %692 = vmatmul.f32.gmra.mxu0 %v436
        %v693 = vpop.f32.mrf.mxu0
        %v694 = vadd.f32 0.0, %v693
        %695 = vmatmul.f32.gmra.mxu0 %v439
        %v696 = vpop.f32.mrf.mxu0
        %v697 = vadd.f32 0.0, %v696
        %698 = vmatmul.f32.gmra.mxu0 %v442
        %v699 = vpop.f32.mrf.mxu0
        %v700 = vadd.f32 0.0, %v699
        %701 = vmatmul.f32.gmra.mxu0 %v445
        %v702 = vpop.f32.mrf.mxu0
        %v703 = vadd.f32 0.0, %v702
        %704 = vmatmul.f32.gmra.mxu0 %v448
        %v705 = vpop.f32.mrf.mxu0
        %v706 = vadd.f32 0.0, %v705
        %707 = vmatmul.f32.gmra.mxu0 %v451
        %v708 = vpop.f32.mrf.mxu0
        %v709 = vadd.f32 0.0, %v708
        %710 = vmatmul.f32.gmra.mxu0 %v454
        %v711 = vpop.f32.mrf.mxu0
        %v712 = vadd.f32 0.0, %v711
        %713 = vmatmul.f32.gmra.mxu0 %v457
        %v714 = vpop.f32.mrf.mxu0
        %v715 = vadd.f32 0.0, %v714
        %716 = vmatmul.f32.gmra.mxu0 %v460
        %v717 = vpop.f32.mrf.mxu0
        %v718 = vadd.f32 0.0, %v717
        %719 = vmatmul.f32.gmra.mxu0 %v463
        %v720 = vpop.f32.mrf.mxu0
        %v721 = vadd.f32 0.0, %v720
        %722 = vmatmul.f32.gmra.mxu0 %v466
        %v723 = vpop.f32.mrf.mxu0
        %v724 = vadd.f32 0.0, %v723
        %725 = vmatmul.f32.gmra.mxu0 %v469
        %v726 = vpop.f32.mrf.mxu0
        %v727 = vadd.f32 0.0, %v726
        %728 = vmatmul.f32.gmra.mxu0 %v472
        %v729 = vpop.f32.mrf.mxu0
        %v730 = vadd.f32 0.0, %v729
        %731 = vmatmul.f32.gmra.mxu0 %v475
        %v732 = vpop.f32.mrf.mxu0
        %v733 = vadd.f32 0.0, %v732
        %734 = vmatmul.f32.gmra.mxu0 %v478
        %v735 = vpop.f32.mrf.mxu0
        %v736 = vadd.f32 0.0, %v735
        %737 = vmatmul.f32.gmra.mxu0 %v481
        %v738 = vpop.f32.mrf.mxu0
        %v739 = vadd.f32 0.0, %v738
        %740 = vmatmul.f32.gmra.mxu0 %v484
        %v741 = vpop.f32.mrf.mxu0
        %v742 = vadd.f32 0.0, %v741
        %743 = vmatmul.f32.gmra.mxu0 %v487
        %v744 = vpop.f32.mrf.mxu0
        %v745 = vadd.f32 0.0, %v744
        %746 = vmatmul.f32.gmra.mxu0 %v490
        %v747 = vpop.f32.mrf.mxu0
        %v748 = vadd.f32 0.0, %v747
        %749 = vmatmul.f32.gmra.mxu0 %v493
        %v750 = vpop.f32.mrf.mxu0
        %v751 = vadd.f32 0.0, %v750
        %752 = vmatmul.f32.gmra.mxu0 %v496
        %v753 = vpop.f32.mrf.mxu0
        %v754 = vadd.f32 0.0, %v753
        %755 = vmatmul.f32.gmra.mxu0 %v499
        %v756 = vpop.f32.mrf.mxu0
        %v757 = vadd.f32 0.0, %v756
        %758 = vmatmul.f32.gmra.mxu0 %v502
        %v759 = vpop.f32.mrf.mxu0
        %v760 = vadd.f32 0.0, %v759
        %761 = vmatmul.f32.gmra.mxu0 %v505
        %v762 = vpop.f32.mrf.mxu0
        %v763 = vadd.f32 0.0, %v762
        %764 = vmatmul.f32.gmra.mxu0 %v508
        %v765 = vpop.f32.mrf.mxu0
        %v766 = vadd.f32 0.0, %v765
        %767 = vmatmul.f32.gmra.mxu0 %v511
        %v768 = vpop.f32.mrf.mxu0
        %v769 = vadd.f32 0.0, %v768
        %770 = vmatmul.f32.gmra.mxu0 %v514
        %v771 = vpop.f32.mrf.mxu0
        %v772 = vadd.f32 0.0, %v771
        %773 = vmatmul.f32.gmra.mxu0 %v517
        %v774 = vpop.f32.mrf.mxu0
        %v775 = vadd.f32 0.0, %v774
        %776 = vmatmul.f32.gmra.mxu0 %v520
        %v777 = vpop.f32.mrf.mxu0
        %v778 = vadd.f32 0.0, %v777
        %779 = vmatmul.f32.gmra.mxu0 %v523
        %v780 = vpop.f32.mrf.mxu0
        %v781 = vadd.f32 0.0, %v780
        %782 = vmatmul.f32.gmra.mxu0 %v526
        %v783 = vpop.f32.mrf.mxu0
        %v784 = vadd.f32 0.0, %v783
        %785 = vmatmul.f32.gmra.mxu0 %v529
        %v786 = vpop.f32.mrf.mxu0
        %v787 = vadd.f32 0.0, %v786
        %788 = vmatmul.f32.gmra.mxu0 %v532
        %v789 = vpop.f32.mrf.mxu0
        %v790 = vadd.f32 0.0, %v789
        %791 = vmatmul.f32.gmra.mxu0 %v535
        %v792 = vpop.f32.mrf.mxu0
        %v793 = vadd.f32 0.0, %v792
        %794 = vmatmul.f32.gmra.mxu0 %v538
        %v795 = vpop.f32.mrf.mxu0
        %v796 = vadd.f32 0.0, %v795
        %797 = vmatmul.f32.gmra.mxu0 %v541
        %v798 = vpop.f32.mrf.mxu0
        %v799 = vadd.f32 0.0, %v798
        %800 = vmatmul.f32.gmra.mxu0 %v544
        %v801 = vpop.f32.mrf.mxu0
        %v802 = vadd.f32 0.0, %v801
        %803 = vmatmul.f32.gmra.mxu0 %v547
        %v804 = vpop.f32.mrf.mxu0
        %v805 = vadd.f32 0.0, %v804
        %806 = vmatmul.f32.gmra.mxu0 %v550
        %v807 = vpop.f32.mrf.mxu0
        %v808 = vadd.f32 0.0, %v807
        %809 = vmatmul.f32.gmra.mxu0 %v553
        %v810 = vpop.f32.mrf.mxu0
        %v811 = vadd.f32 0.0, %v810
        %812 = vmatmul.f32.gmra.mxu0 %v556
        %v813 = vpop.f32.mrf.mxu0
        %v814 = vadd.f32 0.0, %v813
        %815 = vmatmul.f32.gmra.mxu0 %v559
        %v816 = vpop.f32.mrf.mxu0
        %v817 = vadd.f32 0.0, %v816
        %818 = vmatmul.f32.gmra.mxu0 %v562
        %v819 = vpop.f32.mrf.mxu0
        %v820 = vadd.f32 0.0, %v819
        %821 = vmatmul.f32.gmra.mxu0 %v565
        %v822 = vpop.f32.mrf.mxu0
        %v823 = vadd.f32 0.0, %v822
        %824 = vmatmul.f32.gmra.mxu0 %v568
        %v825 = vpop.f32.mrf.mxu0
        %v826 = vadd.f32 0.0, %v825
        %827 = vmatmul.f32.gmra.mxu0 %v571
        %v828 = vpop.f32.mrf.mxu0
        %v829 = vadd.f32 0.0, %v828
        %830 = vmatmul.f32.gmra.mxu0 %v574
        %v831 = vpop.f32.mrf.mxu0
        %v832 = vadd.f32 0.0, %v831
        %833 = vmatmul.f32.gmra.mxu0 %v577
        %v834 = vpop.f32.mrf.mxu0
        %v835 = vadd.f32 0.0, %v834
        %836 = vmatmul.f32.gmra.mxu0 %v580
        %v837 = vpop.f32.mrf.mxu0
        %v838 = vadd.f32 0.0, %v837
        %839 = vmatmul.f32.gmra.mxu0 %v583
        %v840 = vpop.f32.mrf.mxu0
        %v841 = vadd.f32 0.0, %v840
        %842 = vmatmul.f32.gmra.mxu0 %v586
        %v843 = vpop.f32.mrf.mxu0
        %v844 = vadd.f32 0.0, %v843
        %845 = vdwg.mxu0
        %846 = vmatpush.msra.mxu0 %v620
        %847 = vmatpush.msra.mxu0 %v619
        %848 = vmatpush.msra.mxu0 %v618
        %849 = vmatpush.msra.mxu0 %v617
        %850 = vmatpush.msra.mxu0 %v616
        %851 = vmatpush.msra.mxu0 %v615
        %852 = vmatpush.msra.mxu0 %v614
        %853 = vmatpush.msra.mxu0 %v613
        %854 = vmatpush.msra.mxu0 %v612
        %855 = vmatpush.msra.mxu0 %v611
        %856 = vmatpush.msra.mxu0 %v610
        %857 = vmatpush.msra.mxu0 %v609
        %858 = vmatpush.msra.mxu0 %v608
        %859 = vmatpush.msra.mxu0 %v607
        %860 = vmatpush.msra.mxu0 %v606
        %861 = vmatpush.msra.mxu0 %v605
        %862 = vmatmul.f32.gmra.mxu0 %v398
        %v863 = vpop.f32.mrf.mxu0
        %v864 = vadd.f32 %v655, %v863
        %865 = vmatmul.f32.gmra.mxu0 %v401
        %v866 = vpop.f32.mrf.mxu0
        %v867 = vadd.f32 %v658, %v866
        %868 = vmatmul.f32.gmra.mxu0 %v404
        %v869 = vpop.f32.mrf.mxu0
        %v870 = vadd.f32 %v661, %v869
        %871 = vmatmul.f32.gmra.mxu0 %v407
        %v872 = vpop.f32.mrf.mxu0
        %v873 = vadd.f32 %v664, %v872
        %874 = vmatmul.f32.gmra.mxu0 %v410
        %v875 = vpop.f32.mrf.mxu0
        %v876 = vadd.f32 %v667, %v875
        %877 = vmatmul.f32.gmra.mxu0 %v413
        %v878 = vpop.f32.mrf.mxu0
        %v879 = vadd.f32 %v670, %v878
        %880 = vmatmul.f32.gmra.mxu0 %v416
        %v881 = vpop.f32.mrf.mxu0
        %v882 = vadd.f32 %v673, %v881
        %883 = vmatmul.f32.gmra.mxu0 %v419
        %v884 = vpop.f32.mrf.mxu0
        %v885 = vadd.f32 %v676, %v884
        %886 = vmatmul.f32.gmra.mxu0 %v422
        %v887 = vpop.f32.mrf.mxu0
        %v888 = vadd.f32 %v679, %v887
        %889 = vmatmul.f32.gmra.mxu0 %v425
        %v890 = vpop.f32.mrf.mxu0
        %v891 = vadd.f32 %v682, %v890
        %892 = vmatmul.f32.gmra.mxu0 %v428
        %v893 = vpop.f32.mrf.mxu0
        %v894 = vadd.f32 %v685, %v893
        %895 = vmatmul.f32.gmra.mxu0 %v431
        %v896 = vpop.f32.mrf.mxu0
        %v897 = vadd.f32 %v688, %v896
        %898 = vmatmul.f32.gmra.mxu0 %v434
        %v899 = vpop.f32.mrf.mxu0
        %v900 = vadd.f32 %v691, %v899
        %901 = vmatmul.f32.gmra.mxu0 %v437
        %v902 = vpop.f32.mrf.mxu0
        %v903 = vadd.f32 %v694, %v902
        %904 = vmatmul.f32.gmra.mxu0 %v440
        %v905 = vpop.f32.mrf.mxu0
        %v906 = vadd.f32 %v697, %v905
        %907 = vmatmul.f32.gmra.mxu0 %v443
        %v908 = vpop.f32.mrf.mxu0
        %v909 = vadd.f32 %v700, %v908
        %910 = vmatmul.f32.gmra.mxu0 %v446
        %v911 = vpop.f32.mrf.mxu0
        %v912 = vadd.f32 %v703, %v911
        %913 = vmatmul.f32.gmra.mxu0 %v449
        %v914 = vpop.f32.mrf.mxu0
        %v915 = vadd.f32 %v706, %v914
        %916 = vmatmul.f32.gmra.mxu0 %v452
        %v917 = vpop.f32.mrf.mxu0
        %v918 = vadd.f32 %v709, %v917
        %919 = vmatmul.f32.gmra.mxu0 %v455
        %v920 = vpop.f32.mrf.mxu0
        %v921 = vadd.f32 %v712, %v920
        %922 = vmatmul.f32.gmra.mxu0 %v458
        %v923 = vpop.f32.mrf.mxu0
        %v924 = vadd.f32 %v715, %v923
        %925 = vmatmul.f32.gmra.mxu0 %v461
        %v926 = vpop.f32.mrf.mxu0
        %v927 = vadd.f32 %v718, %v926
        %928 = vmatmul.f32.gmra.mxu0 %v464
        %v929 = vpop.f32.mrf.mxu0
        %v930 = vadd.f32 %v721, %v929
        %931 = vmatmul.f32.gmra.mxu0 %v467
        %v932 = vpop.f32.mrf.mxu0
        %v933 = vadd.f32 %v724, %v932
        %934 = vmatmul.f32.gmra.mxu0 %v470
        %v935 = vpop.f32.mrf.mxu0
        %v936 = vadd.f32 %v727, %v935
        %937 = vmatmul.f32.gmra.mxu0 %v473
        %v938 = vpop.f32.mrf.mxu0
        %v939 = vadd.f32 %v730, %v938
        %940 = vmatmul.f32.gmra.mxu0 %v476
        %v941 = vpop.f32.mrf.mxu0
        %v942 = vadd.f32 %v733, %v941
        %943 = vmatmul.f32.gmra.mxu0 %v479
        %v944 = vpop.f32.mrf.mxu0
        %v945 = vadd.f32 %v736, %v944
        %946 = vmatmul.f32.gmra.mxu0 %v482
        %v947 = vpop.f32.mrf.mxu0
        %v948 = vadd.f32 %v739, %v947
        %949 = vmatmul.f32.gmra.mxu0 %v485
        %v950 = vpop.f32.mrf.mxu0
        %v951 = vadd.f32 %v742, %v950
        %952 = vmatmul.f32.gmra.mxu0 %v488
        %v953 = vpop.f32.mrf.mxu0
        %v954 = vadd.f32 %v745, %v953
        %955 = vmatmul.f32.gmra.mxu0 %v491
        %v956 = vpop.f32.mrf.mxu0
        %v957 = vadd.f32 %v748, %v956
        %958 = vmatmul.f32.gmra.mxu0 %v494
        %v959 = vpop.f32.mrf.mxu0
        %v960 = vadd.f32 %v751, %v959
        %961 = vmatmul.f32.gmra.mxu0 %v497
        %v962 = vpop.f32.mrf.mxu0
        %v963 = vadd.f32 %v754, %v962
        %964 = vmatmul.f32.gmra.mxu0 %v500
        %v965 = vpop.f32.mrf.mxu0
        %v966 = vadd.f32 %v757, %v965
        %967 = vmatmul.f32.gmra.mxu0 %v503
        %v968 = vpop.f32.mrf.mxu0
        %v969 = vadd.f32 %v760, %v968
        %970 = vmatmul.f32.gmra.mxu0 %v506
        %v971 = vpop.f32.mrf.mxu0
        %v972 = vadd.f32 %v763, %v971
        %973 = vmatmul.f32.gmra.mxu0 %v509
        %v974 = vpop.f32.mrf.mxu0
        %v975 = vadd.f32 %v766, %v974
        %976 = vmatmul.f32.gmra.mxu0 %v512
        %v977 = vpop.f32.mrf.mxu0
        %v978 = vadd.f32 %v769, %v977
        %979 = vmatmul.f32.gmra.mxu0 %v515
        %v980 = vpop.f32.mrf.mxu0
        %v981 = vadd.f32 %v772, %v980
        %982 = vmatmul.f32.gmra.mxu0 %v518
        %v983 = vpop.f32.mrf.mxu0
        %v984 = vadd.f32 %v775, %v983
        %985 = vmatmul.f32.gmra.mxu0 %v521
        %v986 = vpop.f32.mrf.mxu0
        %v987 = vadd.f32 %v778, %v986
        %988 = vmatmul.f32.gmra.mxu0 %v524
        %v989 = vpop.f32.mrf.mxu0
        %v990 = vadd.f32 %v781, %v989
        %991 = vmatmul.f32.gmra.mxu0 %v527
        %v992 = vpop.f32.mrf.mxu0
        %v993 = vadd.f32 %v784, %v992
        %994 = vmatmul.f32.gmra.mxu0 %v530
        %v995 = vpop.f32.mrf.mxu0
        %v996 = vadd.f32 %v787, %v995
        %997 = vmatmul.f32.gmra.mxu0 %v533
        %v998 = vpop.f32.mrf.mxu0
        %v999 = vadd.f32 %v790, %v998
        %1000 = vmatmul.f32.gmra.mxu0 %v536
        %v1001 = vpop.f32.mrf.mxu0
        %v1002 = vadd.f32 %v793, %v1001
        %1003 = vmatmul.f32.gmra.mxu0 %v539
        %v1004 = vpop.f32.mrf.mxu0
        %v1005 = vadd.f32 %v796, %v1004
        %1006 = vmatmul.f32.gmra.mxu0 %v542
        %v1007 = vpop.f32.mrf.mxu0
        %v1008 = vadd.f32 %v799, %v1007
        %1009 = vmatmul.f32.gmra.mxu0 %v545
        %v1010 = vpop.f32.mrf.mxu0
        %v1011 = vadd.f32 %v802, %v1010
        %1012 = vmatmul.f32.gmra.mxu0 %v548
        %v1013 = vpop.f32.mrf.mxu0
        %v1014 = vadd.f32 %v805, %v1013
        %1015 = vmatmul.f32.gmra.mxu0 %v551
        %v1016 = vpop.f32.mrf.mxu0
        %v1017 = vadd.f32 %v808, %v1016
        %1018 = vmatmul.f32.gmra.mxu0 %v554
        %v1019 = vpop.f32.mrf.mxu0
        %v1020 = vadd.f32 %v811, %v1019
        %1021 = vmatmul.f32.gmra.mxu0 %v557
        %v1022 = vpop.f32.mrf.mxu0
        %v1023 = vadd.f32 %v814, %v1022
        %1024 = vmatmul.f32.gmra.mxu0 %v560
        %v1025 = vpop.f32.mrf.mxu0
        %v1026 = vadd.f32 %v817, %v1025
        %1027 = vmatmul.f32.gmra.mxu0 %v563
        %v1028 = vpop.f32.mrf.mxu0
        %v1029 = vadd.f32 %v820, %v1028
        %1030 = vmatmul.f32.gmra.mxu0 %v566
        %v1031 = vpop.f32.mrf.mxu0
        %v1032 = vadd.f32 %v823, %v1031
        %1033 = vmatmul.f32.gmra.mxu0 %v569
        %v1034 = vpop.f32.mrf.mxu0
        %v1035 = vadd.f32 %v826, %v1034
        %1036 = vmatmul.f32.gmra.mxu0 %v572
        %v1037 = vpop.f32.mrf.mxu0
        %v1038 = vadd.f32 %v829, %v1037
        %1039 = vmatmul.f32.gmra.mxu0 %v575
        %v1040 = vpop.f32.mrf.mxu0
        %v1041 = vadd.f32 %v832, %v1040
        %1042 = vmatmul.f32.gmra.mxu0 %v578
        %v1043 = vpop.f32.mrf.mxu0
        %v1044 = vadd.f32 %v835, %v1043
        %1045 = vmatmul.f32.gmra.mxu0 %v581
        %v1046 = vpop.f32.mrf.mxu0
        %v1047 = vadd.f32 %v838, %v1046
        %1048 = vmatmul.f32.gmra.mxu0 %v584
        %v1049 = vpop.f32.mrf.mxu0
        %v1050 = vadd.f32 %v841, %v1049
        %1051 = vmatmul.f32.gmra.mxu0 %v587
        %v1052 = vpop.f32.mrf.mxu0
        %v1053 = vadd.f32 %v844, %v1052
        %1054 = vdwg.mxu0
        %1055 = vmatpush.msra.mxu0 %v636
        %1056 = vmatpush.msra.mxu0 %v635
        %1057 = vmatpush.msra.mxu0 %v634
        %1058 = vmatpush.msra.mxu0 %v633
        %1059 = vmatpush.msra.mxu0 %v632
        %1060 = vmatpush.msra.mxu0 %v631
        %1061 = vmatpush.msra.mxu0 %v630
        %1062 = vmatpush.msra.mxu0 %v629
        %1063 = vmatpush.msra.mxu0 %v628
        %1064 = vmatpush.msra.mxu0 %v627
        %1065 = vmatpush.msra.mxu0 %v626
        %1066 = vmatpush.msra.mxu0 %v625
        %1067 = vmatpush.msra.mxu0 %v624
        %1068 = vmatpush.msra.mxu0 %v623
        %1069 = vmatpush.msra.mxu0 %v622
        %1070 = vmatpush.msra.mxu0 %v621
        %1071 = vmatmul.f32.gmra.mxu0 %v399
        %v1072 = vpop.f32.mrf.mxu0
        %v1073 = vadd.f32 %v864, %v1072
        %1074 = vmatmul.f32.gmra.mxu0 %v402
        %v1075 = vpop.f32.mrf.mxu0
        %v1076 = vadd.f32 %v867, %v1075
        %1077 = vmatmul.f32.gmra.mxu0 %v405
        %v1078 = vpop.f32.mrf.mxu0
        %v1079 = vadd.f32 %v870, %v1078
        %1080 = vmatmul.f32.gmra.mxu0 %v408
        %v1081 = vpop.f32.mrf.mxu0
        %v1082 = vadd.f32 %v873, %v1081
        %1083 = vmatmul.f32.gmra.mxu0 %v411
        %v1084 = vpop.f32.mrf.mxu0
        %v1085 = vadd.f32 %v876, %v1084
        %1086 = vmatmul.f32.gmra.mxu0 %v414
        %v1087 = vpop.f32.mrf.mxu0
        %v1088 = vadd.f32 %v879, %v1087
        %1089 = vmatmul.f32.gmra.mxu0 %v417
        %v1090 = vpop.f32.mrf.mxu0
        %v1091 = vadd.f32 %v882, %v1090
        %1092 = vmatmul.f32.gmra.mxu0 %v420
        %v1093 = vpop.f32.mrf.mxu0
        %v1094 = vadd.f32 %v885, %v1093
        %1095 = vmatmul.f32.gmra.mxu0 %v423
        %v1096 = vpop.f32.mrf.mxu0
        %v1097 = vadd.f32 %v888, %v1096
        %1098 = vmatmul.f32.gmra.mxu0 %v426
        %v1099 = vpop.f32.mrf.mxu0
        %v1100 = vadd.f32 %v891, %v1099
        %1101 = vmatmul.f32.gmra.mxu0 %v429
        %v1102 = vpop.f32.mrf.mxu0
        %v1103 = vadd.f32 %v894, %v1102
        %1104 = vmatmul.f32.gmra.mxu0 %v432
        %v1105 = vpop.f32.mrf.mxu0
        %v1106 = vadd.f32 %v897, %v1105
        %1107 = vmatmul.f32.gmra.mxu0 %v435
        %v1108 = vpop.f32.mrf.mxu0
        %v1109 = vadd.f32 %v900, %v1108
        %1110 = vmatmul.f32.gmra.mxu0 %v438
        %v1111 = vpop.f32.mrf.mxu0
        %v1112 = vadd.f32 %v903, %v1111
        %1113 = vmatmul.f32.gmra.mxu0 %v441
        %v1114 = vpop.f32.mrf.mxu0
        %v1115 = vadd.f32 %v906, %v1114
        %1116 = vmatmul.f32.gmra.mxu0 %v444
        %v1117 = vpop.f32.mrf.mxu0
        %v1118 = vadd.f32 %v909, %v1117
        %1119 = vmatmul.f32.gmra.mxu0 %v447
        %v1120 = vpop.f32.mrf.mxu0
        %v1121 = vadd.f32 %v912, %v1120
        %1122 = vmatmul.f32.gmra.mxu0 %v450
        %v1123 = vpop.f32.mrf.mxu0
        %v1124 = vadd.f32 %v915, %v1123
        %1125 = vmatmul.f32.gmra.mxu0 %v453
        %v1126 = vpop.f32.mrf.mxu0
        %v1127 = vadd.f32 %v918, %v1126
        %1128 = vmatmul.f32.gmra.mxu0 %v456
        %v1129 = vpop.f32.mrf.mxu0
        %v1130 = vadd.f32 %v921, %v1129
        %1131 = vmatmul.f32.gmra.mxu0 %v459
        %v1132 = vpop.f32.mrf.mxu0
        %v1133 = vadd.f32 %v924, %v1132
        %1134 = vmatmul.f32.gmra.mxu0 %v462
        %v1135 = vpop.f32.mrf.mxu0
        %v1136 = vadd.f32 %v927, %v1135
        %1137 = vmatmul.f32.gmra.mxu0 %v465
        %v1138 = vpop.f32.mrf.mxu0
        %v1139 = vadd.f32 %v930, %v1138
        %1140 = vmatmul.f32.gmra.mxu0 %v468
        %v1141 = vpop.f32.mrf.mxu0
        %v1142 = vadd.f32 %v933, %v1141
        %1143 = vmatmul.f32.gmra.mxu0 %v471
        %v1144 = vpop.f32.mrf.mxu0
        %v1145 = vadd.f32 %v936, %v1144
        %1146 = vmatmul.f32.gmra.mxu0 %v474
        %v1147 = vpop.f32.mrf.mxu0
        %v1148 = vadd.f32 %v939, %v1147
        %1149 = vmatmul.f32.gmra.mxu0 %v477
        %v1150 = vpop.f32.mrf.mxu0
        %v1151 = vadd.f32 %v942, %v1150
        %1152 = vmatmul.f32.gmra.mxu0 %v480
        %v1153 = vpop.f32.mrf.mxu0
        %v1154 = vadd.f32 %v945, %v1153
        %1155 = vmatmul.f32.gmra.mxu0 %v483
        %v1156 = vpop.f32.mrf.mxu0
        %v1157 = vadd.f32 %v948, %v1156
        %1158 = vmatmul.f32.gmra.mxu0 %v486
        %v1159 = vpop.f32.mrf.mxu0
        %v1160 = vadd.f32 %v951, %v1159
        %1161 = vmatmul.f32.gmra.mxu0 %v489
        %v1162 = vpop.f32.mrf.mxu0
        %v1163 = vadd.f32 %v954, %v1162
        %1164 = vmatmul.f32.gmra.mxu0 %v492
        %v1165 = vpop.f32.mrf.mxu0
        %v1166 = vadd.f32 %v957, %v1165
        %1167 = vmatmul.f32.gmra.mxu0 %v495
        %v1168 = vpop.f32.mrf.mxu0
        %v1169 = vadd.f32 %v960, %v1168
        %1170 = vmatmul.f32.gmra.mxu0 %v498
        %v1171 = vpop.f32.mrf.mxu0
        %v1172 = vadd.f32 %v963, %v1171
        %1173 = vmatmul.f32.gmra.mxu0 %v501
        %v1174 = vpop.f32.mrf.mxu0
        %v1175 = vadd.f32 %v966, %v1174
        %1176 = vmatmul.f32.gmra.mxu0 %v504
        %v1177 = vpop.f32.mrf.mxu0
        %v1178 = vadd.f32 %v969, %v1177
        %1179 = vmatmul.f32.gmra.mxu0 %v507
        %v1180 = vpop.f32.mrf.mxu0
        %v1181 = vadd.f32 %v972, %v1180
        %1182 = vmatmul.f32.gmra.mxu0 %v510
        %v1183 = vpop.f32.mrf.mxu0
        %v1184 = vadd.f32 %v975, %v1183
        %1185 = vmatmul.f32.gmra.mxu0 %v513
        %v1186 = vpop.f32.mrf.mxu0
        %v1187 = vadd.f32 %v978, %v1186
        %1188 = vmatmul.f32.gmra.mxu0 %v516
        %v1189 = vpop.f32.mrf.mxu0
        %v1190 = vadd.f32 %v981, %v1189
        %1191 = vmatmul.f32.gmra.mxu0 %v519
        %v1192 = vpop.f32.mrf.mxu0
        %v1193 = vadd.f32 %v984, %v1192
        %1194 = vmatmul.f32.gmra.mxu0 %v522
        %v1195 = vpop.f32.mrf.mxu0
        %v1196 = vadd.f32 %v987, %v1195
        %1197 = vmatmul.f32.gmra.mxu0 %v525
        %v1198 = vpop.f32.mrf.mxu0
        %v1199 = vadd.f32 %v990, %v1198
        %1200 = vmatmul.f32.gmra.mxu0 %v528
        %v1201 = vpop.f32.mrf.mxu0
        %v1202 = vadd.f32 %v993, %v1201
        %1203 = vmatmul.f32.gmra.mxu0 %v531
        %v1204 = vpop.f32.mrf.mxu0
        %v1205 = vadd.f32 %v996, %v1204
        %1206 = vmatmul.f32.gmra.mxu0 %v534
        %v1207 = vpop.f32.mrf.mxu0
        %v1208 = vadd.f32 %v999, %v1207
        %1209 = vmatmul.f32.gmra.mxu0 %v537
        %v1210 = vpop.f32.mrf.mxu0
        %v1211 = vadd.f32 %v1002, %v1210
        %1212 = vmatmul.f32.gmra.mxu0 %v540
        %v1213 = vpop.f32.mrf.mxu0
        %v1214 = vadd.f32 %v1005, %v1213
        %1215 = vmatmul.f32.gmra.mxu0 %v543
        %v1216 = vpop.f32.mrf.mxu0
        %v1217 = vadd.f32 %v1008, %v1216
        %1218 = vmatmul.f32.gmra.mxu0 %v546
        %v1219 = vpop.f32.mrf.mxu0
        %v1220 = vadd.f32 %v1011, %v1219
        %1221 = vmatmul.f32.gmra.mxu0 %v549
        %v1222 = vpop.f32.mrf.mxu0
        %v1223 = vadd.f32 %v1014, %v1222
        %1224 = vmatmul.f32.gmra.mxu0 %v552
        %v1225 = vpop.f32.mrf.mxu0
        %v1226 = vadd.f32 %v1017, %v1225
        %1227 = vmatmul.f32.gmra.mxu0 %v555
        %v1228 = vpop.f32.mrf.mxu0
        %v1229 = vadd.f32 %v1020, %v1228
        %1230 = vmatmul.f32.gmra.mxu0 %v558
        %v1231 = vpop.f32.mrf.mxu0
        %v1232 = vadd.f32 %v1023, %v1231
        %1233 = vmatmul.f32.gmra.mxu0 %v561
        %v1234 = vpop.f32.mrf.mxu0
        %v1235 = vadd.f32 %v1026, %v1234
        %1236 = vmatmul.f32.gmra.mxu0 %v564
        %v1237 = vpop.f32.mrf.mxu0
        %v1238 = vadd.f32 %v1029, %v1237
        %1239 = vmatmul.f32.gmra.mxu0 %v567
        %v1240 = vpop.f32.mrf.mxu0
        %v1241 = vadd.f32 %v1032, %v1240
        %1242 = vmatmul.f32.gmra.mxu0 %v570
        %v1243 = vpop.f32.mrf.mxu0
        %v1244 = vadd.f32 %v1035, %v1243
        %1245 = vmatmul.f32.gmra.mxu0 %v573
        %v1246 = vpop.f32.mrf.mxu0
        %v1247 = vadd.f32 %v1038, %v1246
        %1248 = vmatmul.f32.gmra.mxu0 %v576
        %v1249 = vpop.f32.mrf.mxu0
        %v1250 = vadd.f32 %v1041, %v1249
        %1251 = vmatmul.f32.gmra.mxu0 %v579
        %v1252 = vpop.f32.mrf.mxu0
        %v1253 = vadd.f32 %v1044, %v1252
        %1254 = vmatmul.f32.gmra.mxu0 %v582
        %v1255 = vpop.f32.mrf.mxu0
        %v1256 = vadd.f32 %v1047, %v1255
        %1257 = vmatmul.f32.gmra.mxu0 %v585
        %v1258 = vpop.f32.mrf.mxu0
        %v1259 = vadd.f32 %v1050, %v1258
        %1260 = vmatmul.f32.gmra.mxu0 %v588
        %v1261 = vpop.f32.mrf.mxu0
        %v1262 = vadd.f32 %v1053, %v1261
        %1263 = vdwg.mxu0
        %v1264 = vadd.f32 %v333, %v1073
        %v1265 = vadd.f32 %v334, %v1076
        %v1266 = vadd.f32 %v335, %v1079
        %v1267 = vadd.f32 %v336, %v1082
        %v1268 = vadd.f32 %v337, %v1085
        %v1269 = vadd.f32 %v338, %v1088
        %v1270 = vadd.f32 %v339, %v1091
        %v1271 = vadd.f32 %v340, %v1094
        %v1272 = vadd.f32 %v341, %v1097
        %v1273 = vadd.f32 %v342, %v1100
        %v1274 = vadd.f32 %v343, %v1103
        %v1275 = vadd.f32 %v344, %v1106
        %v1276 = vadd.f32 %v345, %v1109
        %v1277 = vadd.f32 %v346, %v1112
        %v1278 = vadd.f32 %v347, %v1115
        %v1279 = vadd.f32 %v348, %v1118
        %v1280 = vadd.f32 %v349, %v1121
        %v1281 = vadd.f32 %v350, %v1124
        %v1282 = vadd.f32 %v351, %v1127
        %v1283 = vadd.f32 %v352, %v1130
        %v1284 = vadd.f32 %v353, %v1133
        %v1285 = vadd.f32 %v354, %v1136
        %v1286 = vadd.f32 %v355, %v1139
        %v1287 = vadd.f32 %v356, %v1142
        %v1288 = vadd.f32 %v357, %v1145
        %v1289 = vadd.f32 %v358, %v1148
        %v1290 = vadd.f32 %v359, %v1151
        %v1291 = vadd.f32 %v360, %v1154
        %v1292 = vadd.f32 %v361, %v1157
        %v1293 = vadd.f32 %v362, %v1160
        %v1294 = vadd.f32 %v363, %v1163
        %v1295 = vadd.f32 %v364, %v1166
        %v1296 = vadd.f32 %v365, %v1169
        %v1297 = vadd.f32 %v366, %v1172
        %v1298 = vadd.f32 %v367, %v1175
        %v1299 = vadd.f32 %v368, %v1178
        %v1300 = vadd.f32 %v369, %v1181
        %v1301 = vadd.f32 %v370, %v1184
        %v1302 = vadd.f32 %v371, %v1187
        %v1303 = vadd.f32 %v372, %v1190
        %v1304 = vadd.f32 %v373, %v1193
        %v1305 = vadd.f32 %v374, %v1196
        %v1306 = vadd.f32 %v375, %v1199
        %v1307 = vadd.f32 %v376, %v1202
        %v1308 = vadd.f32 %v377, %v1205
        %v1309 = vadd.f32 %v378, %v1208
        %v1310 = vadd.f32 %v379, %v1211
        %v1311 = vadd.f32 %v380, %v1214
        %v1312 = vadd.f32 %v381, %v1217
        %v1313 = vadd.f32 %v382, %v1220
        %v1314 = vadd.f32 %v383, %v1223
        %v1315 = vadd.f32 %v384, %v1226
        %v1316 = vadd.f32 %v385, %v1229
        %v1317 = vadd.f32 %v386, %v1232
        %v1318 = vadd.f32 %v387, %v1235
        %v1319 = vadd.f32 %v388, %v1238
        %v1320 = vadd.f32 %v389, %v1241
        %v1321 = vadd.f32 %v390, %v1244
        %v1322 = vadd.f32 %v391, %v1247
        %v1323 = vadd.f32 %v392, %v1250
        %v1324 = vadd.f32 %v393, %v1253
        %v1325 = vadd.f32 %v394, %v1256
        %v1326 = vadd.f32 %v395, %v1259
        %v1327 = vadd.f32 %v396, %v1262
        %1328 = vst [vmem:[#allocation2] sm:$0xff] %v1264
        %1329 = vst [vmem:[#allocation2 + $0x8] sm:$0xff] %v1265
        %1330 = vst [vmem:[#allocation2 + $0x10] sm:$0xff] %v1266
        %1331 = vst [vmem:[#allocation2 + $0x18] sm:$0xff] %v1267
        %1332 = vst [vmem:[#allocation2 + $0x20] sm:$0xff] %v1268
        %1333 = vst [vmem:[#allocation2 + $0x28] sm:$0xff] %v1269
        %1334 = vst [vmem:[#allocation2 + $0x30] sm:$0xff] %v1270
        %1335 = vst [vmem:[#allocation2 + $0x38] sm:$0xff] %v1271
        %1336 = vst [vmem:[#allocation2 + $0x40] sm:$0xff] %v1272
        %1337 = vst [vmem:[#allocation2 + $0x48] sm:$0xff] %v1273
        %1338 = vst [vmem:[#allocation2 + $0x50] sm:$0xff] %v1274
        %1339 = vst [vmem:[#allocation2 + $0x58] sm:$0xff] %v1275
        %1340 = vst [vmem:[#allocation2 + $0x60] sm:$0xff] %v1276
        %1341 = vst [vmem:[#allocation2 + $0x68] sm:$0xff] %v1277
        %1342 = vst [vmem:[#allocation2 + $0x70] sm:$0xff] %v1278
        %1343 = vst [vmem:[#allocation2 + $0x78] sm:$0xff] %v1279
        %1344 = vst [vmem:[#allocation2 + $0x80] sm:$0xff] %v1280
        %1345 = vst [vmem:[#allocation2 + $0x88] sm:$0xff] %v1281
        %1346 = vst [vmem:[#allocation2 + $0x90] sm:$0xff] %v1282
        %1347 = vst [vmem:[#allocation2 + $0x98] sm:$0xff] %v1283
        %1348 = vst [vmem:[#allocation2 + $0xa0] sm:$0xff] %v1284
        %1349 = vst [vmem:[#allocation2 + $0xa8] sm:$0xff] %v1285
        %1350 = vst [vmem:[#allocation2 + $0xb0] sm:$0xff] %v1286
        %1351 = vst [vmem:[#allocation2 + $0xb8] sm:$0xff] %v1287
        %1352 = vst [vmem:[#allocation2 + $0xc0] sm:$0xff] %v1288
        %1353 = vst [vmem:[#allocation2 + $0xc8] sm:$0xff] %v1289
        %1354 = vst [vmem:[#allocation2 + $0xd0] sm:$0xff] %v1290
        %1355 = vst [vmem:[#allocation2 + $0xd8] sm:$0xff] %v1291
        %1356 = vst [vmem:[#allocation2 + $0xe0] sm:$0xff] %v1292
        %1357 = vst [vmem:[#allocation2 + $0xe8] sm:$0xff] %v1293
        %1358 = vst [vmem:[#allocation2 + $0xf0] sm:$0xff] %v1294
        %1359 = vst [vmem:[#allocation2 + $0xf8] sm:$0xff] %v1295
        %1360 = vst [vmem:[#allocation2 + $0x100] sm:$0xff] %v1296
        %1361 = vst [vmem:[#allocation2 + $0x108] sm:$0xff] %v1297
        %1362 = vst [vmem:[#allocation2 + $0x110] sm:$0xff] %v1298
        %1363 = vst [vmem:[#allocation2 + $0x118] sm:$0xff] %v1299
        %1364 = vst [vmem:[#allocation2 + $0x120] sm:$0xff] %v1300
        %1365 = vst [vmem:[#allocation2 + $0x128] sm:$0xff] %v1301
        %1366 = vst [vmem:[#allocation2 + $0x130] sm:$0xff] %v1302
        %1367 = vst [vmem:[#allocation2 + $0x138] sm:$0xff] %v1303
        %1368 = vst [vmem:[#allocation2 + $0x140] sm:$0xff] %v1304
        %1369 = vst [vmem:[#allocation2 + $0x148] sm:$0xff] %v1305
        %1370 = vst [vmem:[#allocation2 + $0x150] sm:$0xff] %v1306
        %1371 = vst [vmem:[#allocation2 + $0x158] sm:$0xff] %v1307
        %1372 = vst [vmem:[#allocation2 + $0x160] sm:$0xff] %v1308
        %1373 = vst [vmem:[#allocation2 + $0x168] sm:$0xff] %v1309
        %1374 = vst [vmem:[#allocation2 + $0x170] sm:$0xff] %v1310
        %1375 = vst [vmem:[#allocation2 + $0x178] sm:$0xff] %v1311
        %1376 = vst [vmem:[#allocation2 + $0x180] sm:$0xff] %v1312
        %1377 = vst [vmem:[#allocation2 + $0x188] sm:$0xff] %v1313
        %1378 = vst [vmem:[#allocation2 + $0x190] sm:$0xff] %v1314
        %1379 = vst [vmem:[#allocation2 + $0x198] sm:$0xff] %v1315
        %1380 = vst [vmem:[#allocation2 + $0x1a0] sm:$0xff] %v1316
        %1381 = vst [vmem:[#allocation2 + $0x1a8] sm:$0xff] %v1317
        %1382 = vst [vmem:[#allocation2 + $0x1b0] sm:$0xff] %v1318
        %1383 = vst [vmem:[#allocation2 + $0x1b8] sm:$0xff] %v1319
        %1384 = vst [vmem:[#allocation2 + $0x1c0] sm:$0xff] %v1320
        %1385 = vst [vmem:[#allocation2 + $0x1c8] sm:$0xff] %v1321
        %1386 = vst [vmem:[#allocation2 + $0x1d0] sm:$0xff] %v1322
        %1387 = vst [vmem:[#allocation2 + $0x1d8] sm:$0xff] %v1323
        %1388 = vst [vmem:[#allocation2 + $0x1e0] sm:$0xff] %v1324
        %1389 = vst [vmem:[#allocation2 + $0x1e8] sm:$0xff] %v1325
        %1390 = vst [vmem:[#allocation2 + $0x1f0] sm:$0xff] %v1326
        %1391 = vst [vmem:[#allocation2 + $0x1f8] sm:$0xff] %v1327
        %p1392 = scmp.eq.s32.totalorder %s30, 2
        // Predicated region
        $region41: #{tpu_custom_call.1} parent=27 // pred_check
          %p1393 = pneg %p1392
        $region42: #{tpu_custom_call.1} parent=27 // pred_check_branch
          %1395 = sbr.rel (%p1393) target = $region44
        $region43: #{tpu_custom_call.1} parent=27 // pred_region
          %v1396 = vld [vmem:[#allocation2] sm:$0xff]
          %v1397 = vld [vmem:[#allocation2 + $0x8] sm:$0xff]
          %v1398 = vld [vmem:[#allocation2 + $0x10] sm:$0xff]
          %v1399 = vld [vmem:[#allocation2 + $0x18] sm:$0xff]
          %v1400 = vld [vmem:[#allocation2 + $0x20] sm:$0xff]
          %v1401 = vld [vmem:[#allocation2 + $0x28] sm:$0xff]
          %v1402 = vld [vmem:[#allocation2 + $0x30] sm:$0xff]
          %v1403 = vld [vmem:[#allocation2 + $0x38] sm:$0xff]
          %v1404 = vld [vmem:[#allocation2 + $0x40] sm:$0xff]
          %v1405 = vld [vmem:[#allocation2 + $0x48] sm:$0xff]
          %v1406 = vld [vmem:[#allocation2 + $0x50] sm:$0xff]
          %v1407 = vld [vmem:[#allocation2 + $0x58] sm:$0xff]
          %v1408 = vld [vmem:[#allocation2 + $0x60] sm:$0xff]
          %v1409 = vld [vmem:[#allocation2 + $0x68] sm:$0xff]
          %v1410 = vld [vmem:[#allocation2 + $0x70] sm:$0xff]
          %v1411 = vld [vmem:[#allocation2 + $0x78] sm:$0xff]
          %v1412 = vld [vmem:[#allocation2 + $0x80] sm:$0xff]
          %v1413 = vld [vmem:[#allocation2 + $0x88] sm:$0xff]
          %v1414 = vld [vmem:[#allocation2 + $0x90] sm:$0xff]
          %v1415 = vld [vmem:[#allocation2 + $0x98] sm:$0xff]
          %v1416 = vld [vmem:[#allocation2 + $0xa0] sm:$0xff]
          %v1417 = vld [vmem:[#allocation2 + $0xa8] sm:$0xff]
          %v1418 = vld [vmem:[#allocation2 + $0xb0] sm:$0xff]
          %v1419 = vld [vmem:[#allocation2 + $0xb8] sm:$0xff]
          %v1420 = vld [vmem:[#allocation2 + $0xc0] sm:$0xff]
          %v1421 = vld [vmem:[#allocation2 + $0xc8] sm:$0xff]
          %v1422 = vld [vmem:[#allocation2 + $0xd0] sm:$0xff]
          %v1423 = vld [vmem:[#allocation2 + $0xd8] sm:$0xff]
          %v1424 = vld [vmem:[#allocation2 + $0xe0] sm:$0xff]
          %v1425 = vld [vmem:[#allocation2 + $0xe8] sm:$0xff]
          %v1426 = vld [vmem:[#allocation2 + $0xf0] sm:$0xff]
          %v1427 = vld [vmem:[#allocation2 + $0xf8] sm:$0xff]
          %v1428 = vld [vmem:[#allocation2 + $0x100] sm:$0xff]
          %v1429 = vld [vmem:[#allocation2 + $0x108] sm:$0xff]
          %v1430 = vld [vmem:[#allocation2 + $0x110] sm:$0xff]
          %v1431 = vld [vmem:[#allocation2 + $0x118] sm:$0xff]
          %v1432 = vld [vmem:[#allocation2 + $0x120] sm:$0xff]
          %v1433 = vld [vmem:[#allocation2 + $0x128] sm:$0xff]
          %v1434 = vld [vmem:[#allocation2 + $0x130] sm:$0xff]
          %v1435 = vld [vmem:[#allocation2 + $0x138] sm:$0xff]
          %v1436 = vld [vmem:[#allocation2 + $0x140] sm:$0xff]
          %v1437 = vld [vmem:[#allocation2 + $0x148] sm:$0xff]
          %v1438 = vld [vmem:[#allocation2 + $0x150] sm:$0xff]
          %v1439 = vld [vmem:[#allocation2 + $0x158] sm:$0xff]
          %v1440 = vld [vmem:[#allocation2 + $0x160] sm:$0xff]
          %v1441 = vld [vmem:[#allocation2 + $0x168] sm:$0xff]
          %v1442 = vld [vmem:[#allocation2 + $0x170] sm:$0xff]
          %v1443 = vld [vmem:[#allocation2 + $0x178] sm:$0xff]
          %v1444 = vld [vmem:[#allocation2 + $0x180] sm:$0xff]
          %v1445 = vld [vmem:[#allocation2 + $0x188] sm:$0xff]
          %v1446 = vld [vmem:[#allocation2 + $0x190] sm:$0xff]
          %v1447 = vld [vmem:[#allocation2 + $0x198] sm:$0xff]
          %v1448 = vld [vmem:[#allocation2 + $0x1a0] sm:$0xff]
          %v1449 = vld [vmem:[#allocation2 + $0x1a8] sm:$0xff]
          %v1450 = vld [vmem:[#allocation2 + $0x1b0] sm:$0xff]
          %v1451 = vld [vmem:[#allocation2 + $0x1b8] sm:$0xff]
          %v1452 = vld [vmem:[#allocation2 + $0x1c0] sm:$0xff]
          %v1453 = vld [vmem:[#allocation2 + $0x1c8] sm:$0xff]
          %v1454 = vld [vmem:[#allocation2 + $0x1d0] sm:$0xff]
          %v1455 = vld [vmem:[#allocation2 + $0x1d8] sm:$0xff]
          %v1456 = vld [vmem:[#allocation2 + $0x1e0] sm:$0xff]
          %v1457 = vld [vmem:[#allocation2 + $0x1e8] sm:$0xff]
          %v1458 = vld [vmem:[#allocation2 + $0x1f0] sm:$0xff]
          %v1459 = vld [vmem:[#allocation2 + $0x1f8] sm:$0xff]
          %1460 = vst [vmem:[#allocation8] sm:$0xff] %v1396
          %1461 = vst [vmem:[#allocation8 + $0x8] sm:$0xff] %v1397
          %1462 = vst [vmem:[#allocation8 + $0x10] sm:$0xff] %v1398
          %1463 = vst [vmem:[#allocation8 + $0x18] sm:$0xff] %v1399
          %1464 = vst [vmem:[#allocation8 + $0x20] sm:$0xff] %v1400
          %1465 = vst [vmem:[#allocation8 + $0x28] sm:$0xff] %v1401
          %1466 = vst [vmem:[#allocation8 + $0x30] sm:$0xff] %v1402
          %1467 = vst [vmem:[#allocation8 + $0x38] sm:$0xff] %v1403
          %1468 = vst [vmem:[#allocation8 + $0x40] sm:$0xff] %v1404
          %1469 = vst [vmem:[#allocation8 + $0x48] sm:$0xff] %v1405
          %1470 = vst [vmem:[#allocation8 + $0x50] sm:$0xff] %v1406
          %1471 = vst [vmem:[#allocation8 + $0x58] sm:$0xff] %v1407
          %1472 = vst [vmem:[#allocation8 + $0x60] sm:$0xff] %v1408
          %1473 = vst [vmem:[#allocation8 + $0x68] sm:$0xff] %v1409
          %1474 = vst [vmem:[#allocation8 + $0x70] sm:$0xff] %v1410
          %1475 = vst [vmem:[#allocation8 + $0x78] sm:$0xff] %v1411
          %1476 = vst [vmem:[#allocation8 + $0x80] sm:$0xff] %v1412
          %1477 = vst [vmem:[#allocation8 + $0x88] sm:$0xff] %v1413
          %1478 = vst [vmem:[#allocation8 + $0x90] sm:$0xff] %v1414
          %1479 = vst [vmem:[#allocation8 + $0x98] sm:$0xff] %v1415
          %1480 = vst [vmem:[#allocation8 + $0xa0] sm:$0xff] %v1416
          %1481 = vst [vmem:[#allocation8 + $0xa8] sm:$0xff] %v1417
          %1482 = vst [vmem:[#allocation8 + $0xb0] sm:$0xff] %v1418
          %1483 = vst [vmem:[#allocation8 + $0xb8] sm:$0xff] %v1419
          %1484 = vst [vmem:[#allocation8 + $0xc0] sm:$0xff] %v1420
          %1485 = vst [vmem:[#allocation8 + $0xc8] sm:$0xff] %v1421
          %1486 = vst [vmem:[#allocation8 + $0xd0] sm:$0xff] %v1422
          %1487 = vst [vmem:[#allocation8 + $0xd8] sm:$0xff] %v1423
          %1488 = vst [vmem:[#allocation8 + $0xe0] sm:$0xff] %v1424
          %1489 = vst [vmem:[#allocation8 + $0xe8] sm:$0xff] %v1425
          %1490 = vst [vmem:[#allocation8 + $0xf0] sm:$0xff] %v1426
          %1491 = vst [vmem:[#allocation8 + $0xf8] sm:$0xff] %v1427
          %1492 = vst [vmem:[#allocation8 + $0x100] sm:$0xff] %v1428
          %1493 = vst [vmem:[#allocation8 + $0x108] sm:$0xff] %v1429
          %1494 = vst [vmem:[#allocation8 + $0x110] sm:$0xff] %v1430
          %1495 = vst [vmem:[#allocation8 + $0x118] sm:$0xff] %v1431
          %1496 = vst [vmem:[#allocation8 + $0x120] sm:$0xff] %v1432
          %1497 = vst [vmem:[#allocation8 + $0x128] sm:$0xff] %v1433
          %1498 = vst [vmem:[#allocation8 + $0x130] sm:$0xff] %v1434
          %1499 = vst [vmem:[#allocation8 + $0x138] sm:$0xff] %v1435
          %1500 = vst [vmem:[#allocation8 + $0x140] sm:$0xff] %v1436
          %1501 = vst [vmem:[#allocation8 + $0x148] sm:$0xff] %v1437
          %1502 = vst [vmem:[#allocation8 + $0x150] sm:$0xff] %v1438
          %1503 = vst [vmem:[#allocation8 + $0x158] sm:$0xff] %v1439
          %1504 = vst [vmem:[#allocation8 + $0x160] sm:$0xff] %v1440
          %1505 = vst [vmem:[#allocation8 + $0x168] sm:$0xff] %v1441
          %1506 = vst [vmem:[#allocation8 + $0x170] sm:$0xff] %v1442
          %1507 = vst [vmem:[#allocation8 + $0x178] sm:$0xff] %v1443
          %1508 = vst [vmem:[#allocation8 + $0x180] sm:$0xff] %v1444
          %1509 = vst [vmem:[#allocation8 + $0x188] sm:$0xff] %v1445
          %1510 = vst [vmem:[#allocation8 + $0x190] sm:$0xff] %v1446
          %1511 = vst [vmem:[#allocation8 + $0x198] sm:$0xff] %v1447
          %1512 = vst [vmem:[#allocation8 + $0x1a0] sm:$0xff] %v1448
          %1513 = vst [vmem:[#allocation8 + $0x1a8] sm:$0xff] %v1449
          %1514 = vst [vmem:[#allocation8 + $0x1b0] sm:$0xff] %v1450
          %1515 = vst [vmem:[#allocation8 + $0x1b8] sm:$0xff] %v1451
          %1516 = vst [vmem:[#allocation8 + $0x1c0] sm:$0xff] %v1452
          %1517 = vst [vmem:[#allocation8 + $0x1c8] sm:$0xff] %v1453
          %1518 = vst [vmem:[#allocation8 + $0x1d0] sm:$0xff] %v1454
          %1519 = vst [vmem:[#allocation8 + $0x1d8] sm:$0xff] %v1455
          %1520 = vst [vmem:[#allocation8 + $0x1e0] sm:$0xff] %v1456
          %1521 = vst [vmem:[#allocation8 + $0x1e8] sm:$0xff] %v1457
          %1522 = vst [vmem:[#allocation8 + $0x1f0] sm:$0xff] %v1458
          %1523 = vst [vmem:[#allocation8 + $0x1f8] sm:$0xff] %v1459
          %v1524 = vadd.f32 %v1396, %v1397
          %v1525 = vadd.f32 %v1524, %v1398
          %v1526 = vadd.f32 %v1525, %v1399
          %v1527 = vadd.f32 %v1526, %v1400
          %v1528 = vadd.f32 %v1527, %v1401
          %v1529 = vadd.f32 %v1528, %v1402
          %v1530 = vadd.f32 %v1529, %v1403
          %v1531 = vadd.f32 %v1530, %v1404
          %v1532 = vadd.f32 %v1531, %v1405
          %v1533 = vadd.f32 %v1532, %v1406
          %v1534 = vadd.f32 %v1533, %v1407
          %v1535 = vadd.f32 %v1534, %v1408
          %v1536 = vadd.f32 %v1535, %v1409
          %v1537 = vadd.f32 %v1536, %v1410
          %v1538 = vadd.f32 %v1537, %v1411
          %v1539 = vadd.f32 %v1538, %v1412
          %v1540 = vadd.f32 %v1539, %v1413
          %v1541 = vadd.f32 %v1540, %v1414
          %v1542 = vadd.f32 %v1541, %v1415
          %v1543 = vadd.f32 %v1542, %v1416
          %v1544 = vadd.f32 %v1543, %v1417
          %v1545 = vadd.f32 %v1544, %v1418
          %v1546 = vadd.f32 %v1545, %v1419
          %v1547 = vadd.f32 %v1546, %v1420
          %v1548 = vadd.f32 %v1547, %v1421
          %v1549 = vadd.f32 %v1548, %v1422
          %v1550 = vadd.f32 %v1549, %v1423
          %v1551 = vadd.f32 %v1550, %v1424
          %v1552 = vadd.f32 %v1551, %v1425
          %v1553 = vadd.f32 %v1552, %v1426
          %v1554 = vadd.f32 %v1553, %v1427
          %v1555 = vadd.f32 %v1554, %v1428
          %v1556 = vadd.f32 %v1555, %v1429
          %v1557 = vadd.f32 %v1556, %v1430
          %v1558 = vadd.f32 %v1557, %v1431
          %v1559 = vadd.f32 %v1558, %v1432
          %v1560 = vadd.f32 %v1559, %v1433
          %v1561 = vadd.f32 %v1560, %v1434
          %v1562 = vadd.f32 %v1561, %v1435
          %v1563 = vadd.f32 %v1562, %v1436
          %v1564 = vadd.f32 %v1563, %v1437
          %v1565 = vadd.f32 %v1564, %v1438
          %v1566 = vadd.f32 %v1565, %v1439
          %v1567 = vadd.f32 %v1566, %v1440
          %v1568 = vadd.f32 %v1567, %v1441
          %v1569 = vadd.f32 %v1568, %v1442
          %v1570 = vadd.f32 %v1569, %v1443
          %v1571 = vadd.f32 %v1570, %v1444
          %v1572 = vadd.f32 %v1571, %v1445
          %v1573 = vadd.f32 %v1572, %v1446
          %v1574 = vadd.f32 %v1573, %v1447
          %v1575 = vadd.f32 %v1574, %v1448
          %v1576 = vadd.f32 %v1575, %v1449
          %v1577 = vadd.f32 %v1576, %v1450
          %v1578 = vadd.f32 %v1577, %v1451
          %v1579 = vadd.f32 %v1578, %v1452
          %v1580 = vadd.f32 %v1579, %v1453
          %v1581 = vadd.f32 %v1580, %v1454
          %v1582 = vadd.f32 %v1581, %v1455
          %v1583 = vadd.f32 %v1582, %v1456
          %v1584 = vadd.f32 %v1583, %v1457
          %v1585 = vadd.f32 %v1584, %v1458
          %v1586 = vadd.f32 %v1585, %v1459
          %v1587 = vrot.slane %v1586, 4
          %v1588 = vadd.f32 %v1586, %v1587
          %v1589 = vrot.slane %v1588, 2
          %v1590 = vadd.f32 %v1588, %v1589
          %v1591 = vrot.slane %v1590, 1
          %v1592 = vadd.f32 %v1590, %v1591
          %v1593 = vmul.f32 %v1396, %v1396
          %v1594 = vmul.f32 %v1397, %v1397
          %v1595 = vmul.f32 %v1398, %v1398
          %v1596 = vmul.f32 %v1399, %v1399
          %v1597 = vmul.f32 %v1400, %v1400
          %v1598 = vmul.f32 %v1401, %v1401
          %v1599 = vmul.f32 %v1402, %v1402
          %v1600 = vmul.f32 %v1403, %v1403
          %v1601 = vmul.f32 %v1404, %v1404
          %v1602 = vmul.f32 %v1405, %v1405
          %v1603 = vmul.f32 %v1406, %v1406
          %v1604 = vmul.f32 %v1407, %v1407
          %v1605 = vmul.f32 %v1408, %v1408
          %v1606 = vmul.f32 %v1409, %v1409
          %v1607 = vmul.f32 %v1410, %v1410
          %v1608 = vmul.f32 %v1411, %v1411
          %v1609 = vmul.f32 %v1412, %v1412
          %v1610 = vmul.f32 %v1413, %v1413
          %v1611 = vmul.f32 %v1414, %v1414
          %v1612 = vmul.f32 %v1415, %v1415
          %v1613 = vmul.f32 %v1416, %v1416
          %v1614 = vmul.f32 %v1417, %v1417
          %v1615 = vmul.f32 %v1418, %v1418
          %v1616 = vmul.f32 %v1419, %v1419
          %v1617 = vmul.f32 %v1420, %v1420
          %v1618 = vmul.f32 %v1421, %v1421
          %v1619 = vmul.f32 %v1422, %v1422
          %v1620 = vmul.f32 %v1423, %v1423
          %v1621 = vmul.f32 %v1424, %v1424
          %v1622 = vmul.f32 %v1425, %v1425
          %v1623 = vmul.f32 %v1426, %v1426
          %v1624 = vmul.f32 %v1427, %v1427
          %v1625 = vmul.f32 %v1428, %v1428
          %v1626 = vmul.f32 %v1429, %v1429
          %v1627 = vmul.f32 %v1430, %v1430
          %v1628 = vmul.f32 %v1431, %v1431
          %v1629 = vmul.f32 %v1432, %v1432
          %v1630 = vmul.f32 %v1433, %v1433
          %v1631 = vmul.f32 %v1434, %v1434
          %v1632 = vmul.f32 %v1435, %v1435
          %v1633 = vmul.f32 %v1436, %v1436
          %v1634 = vmul.f32 %v1437, %v1437
          %v1635 = vmul.f32 %v1438, %v1438
          %v1636 = vmul.f32 %v1439, %v1439
          %v1637 = vmul.f32 %v1440, %v1440
          %v1638 = vmul.f32 %v1441, %v1441
          %v1639 = vmul.f32 %v1442, %v1442
          %v1640 = vmul.f32 %v1443, %v1443
          %v1641 = vmul.f32 %v1444, %v1444
          %v1642 = vmul.f32 %v1445, %v1445
          %v1643 = vmul.f32 %v1446, %v1446
          %v1644 = vmul.f32 %v1447, %v1447
          %v1645 = vmul.f32 %v1448, %v1448
          %v1646 = vmul.f32 %v1449, %v1449
          %v1647 = vmul.f32 %v1450, %v1450
          %v1648 = vmul.f32 %v1451, %v1451
          %v1649 = vmul.f32 %v1452, %v1452
          %v1650 = vmul.f32 %v1453, %v1453
          %v1651 = vmul.f32 %v1454, %v1454
          %v1652 = vmul.f32 %v1455, %v1455
          %v1653 = vmul.f32 %v1456, %v1456
          %v1654 = vmul.f32 %v1457, %v1457
          %v1655 = vmul.f32 %v1458, %v1458
          %v1656 = vmul.f32 %v1459, %v1459
          %v1657 = vadd.f32 %v1593, %v1594
          %v1658 = vadd.f32 %v1657, %v1595
          %v1659 = vadd.f32 %v1658, %v1596
          %v1660 = vadd.f32 %v1659, %v1597
          %v1661 = vadd.f32 %v1660, %v1598
          %v1662 = vadd.f32 %v1661, %v1599
          %v1663 = vadd.f32 %v1662, %v1600
          %v1664 = vadd.f32 %v1663, %v1601
          %v1665 = vadd.f32 %v1664, %v1602
          %v1666 = vadd.f32 %v1665, %v1603
          %v1667 = vadd.f32 %v1666, %v1604
          %v1668 = vadd.f32 %v1667, %v1605
          %v1669 = vadd.f32 %v1668, %v1606
          %v1670 = vadd.f32 %v1669, %v1607
          %v1671 = vadd.f32 %v1670, %v1608
          %v1672 = vadd.f32 %v1671, %v1609
          %v1673 = vadd.f32 %v1672, %v1610
          %v1674 = vadd.f32 %v1673, %v1611
          %v1675 = vadd.f32 %v1674, %v1612
          %v1676 = vadd.f32 %v1675, %v1613
          %v1677 = vadd.f32 %v1676, %v1614
          %v1678 = vadd.f32 %v1677, %v1615
          %v1679 = vadd.f32 %v1678, %v1616
          %v1680 = vadd.f32 %v1679, %v1617
          %v1681 = vadd.f32 %v1680, %v1618
          %v1682 = vadd.f32 %v1681, %v1619
          %v1683 = vadd.f32 %v1682, %v1620
          %v1684 = vadd.f32 %v1683, %v1621
          %v1685 = vadd.f32 %v1684, %v1622
          %v1686 = vadd.f32 %v1685, %v1623
          %v1687 = vadd.f32 %v1686, %v1624
          %v1688 = vadd.f32 %v1687, %v1625
          %v1689 = vadd.f32 %v1688, %v1626
          %v1690 = vadd.f32 %v1689, %v1627
          %v1691 = vadd.f32 %v1690, %v1628
          %v1692 = vadd.f32 %v1691, %v1629
          %v1693 = vadd.f32 %v1692, %v1630
          %v1694 = vadd.f32 %v1693, %v1631
          %v1695 = vadd.f32 %v1694, %v1632
          %v1696 = vadd.f32 %v1695, %v1633
          %v1697 = vadd.f32 %v1696, %v1634
          %v1698 = vadd.f32 %v1697, %v1635
          %v1699 = vadd.f32 %v1698, %v1636
          %v1700 = vadd.f32 %v1699, %v1637
          %v1701 = vadd.f32 %v1700, %v1638
          %v1702 = vadd.f32 %v1701, %v1639
          %v1703 = vadd.f32 %v1702, %v1640
          %v1704 = vadd.f32 %v1703, %v1641
          %v1705 = vadd.f32 %v1704, %v1642
          %v1706 = vadd.f32 %v1705, %v1643
          %v1707 = vadd.f32 %v1706, %v1644
          %v1708 = vadd.f32 %v1707, %v1645
          %v1709 = vadd.f32 %v1708, %v1646
          %v1710 = vadd.f32 %v1709, %v1647
          %v1711 = vadd.f32 %v1710, %v1648
          %v1712 = vadd.f32 %v1711, %v1649
          %v1713 = vadd.f32 %v1712, %v1650
          %v1714 = vadd.f32 %v1713, %v1651
          %v1715 = vadd.f32 %v1714, %v1652
          %v1716 = vadd.f32 %v1715, %v1653
          %v1717 = vadd.f32 %v1716, %v1654
          %v1718 = vadd.f32 %v1717, %v1655
          %v1719 = vadd.f32 %v1718, %v1656
          %v1720 = vrot.slane %v1719, 4
          %v1721 = vadd.f32 %v1719, %v1720
          %v1722 = vrot.slane %v1721, 2
          %v1723 = vadd.f32 %v1721, %v1722
          %v1724 = vrot.slane %v1723, 1
          %v1725 = vadd.f32 %v1723, %v1724
          %vm1726 = vcmask 1040384
          %v1727 = vsel %vm1726, %v1592, %v1725
          %1728 = vst [vmem:[#allocation9] sm:$0x3] %v1727
        $region44: #{tpu_custom_call.1} parent=27 // pred_fallthru
          _
        // Predicated region
        $region45: #{tpu_custom_call.1} parent=27 // pred_check
          %p1729 = pneg %p118
        $region46: #{tpu_custom_call.1} parent=27 // pred_check_branch
          %1731 = sbr.rel (%p1729) target = $region48
        $region47: #{tpu_custom_call.1} parent=27 // pred_region
          %s1732 = smul.u32 64, %s28
          %1734 = vsyncadd [#allocation5], 0
          %s1735 = sadd.s32 %s29, %s1732
          %s1736 = smul.addr %s1735, 8
          %s1737 = scalar_lea.hbm %s2, %s1736
          %s1738 = sshll.u32 [#allocation8], 4
          %s1739 = int_to_ptr.vmem [resolvable:$true] %s1738
          %s1740 = sshll.u32 %s1737, 4
          %s1741 = int_to_ptr.hbm [resolvable:$true] %s1740
          %1746 = dma.vmem_to_hbm [thread:$0]  %s1739, 8192, %s1741, [#allocation5], 128, 128, 8
        $region48: #{tpu_custom_call.1} parent=27 // pred_fallthru
          _
        // Predicated region
        $region49: #{tpu_custom_call.1} parent=27 // pred_check
          %p1747 = pneg %p146
        $region50: #{tpu_custom_call.1} parent=27 // pred_check_branch
          %1749 = sbr.rel (%p1747) target = $region52
        $region51: #{tpu_custom_call.1} parent=27 // pred_region
          %1751 = vsyncadd [#allocation10], 0
          %s1752 = sadd.s32 %s29, %s28
          %s1753 = smul.addr %s1752, 2
          %s1754 = scalar_lea.hbm %s3, %s1753
          %s1756 = sshll.u32 [#allocation9], 4
          %s1757 = int_to_ptr.vmem [resolvable:$true] %s1756
          %s1758 = sshll.u32 %s1754, 4
          %s1759 = int_to_ptr.hbm [resolvable:$true] %s1758
          %1761 = dma.vmem_to_hbm [thread:$0]  %s1757, 32, %s1759, [#allocation10]
        $region52: #{tpu_custom_call.1} parent=27 // pred_fallthru
          _
        // Predicated region
        $region53: #{tpu_custom_call.1} parent=27 // pred_check
          %p1762 = pneg %p118
        $region54: #{tpu_custom_call.1} parent=27 // pred_check_branch
          %1764 = sbr.rel (%p1762) target = $region56
        $region55: #{tpu_custom_call.1} parent=27 // pred_region
          %1766 = dma.done [#allocation5], 8192
        $region56: #{tpu_custom_call.1} parent=27 // pred_fallthru
          _
        // Predicated region
        $region57: #{tpu_custom_call.1} parent=27 // pred_check
          %p1767 = pneg %p146
        $region58: #{tpu_custom_call.1} parent=27 // pred_check_branch
          %1769 = sbr.rel (%p1767) target = $region60
        $region59: #{tpu_custom_call.1} parent=27 // pred_region
          %1771 = dma.done [#allocation10], 32
        $region60: #{tpu_custom_call.1} parent=27 // pred_fallthru
          _
      $region28: #{tpu_custom_call.1} parent=5 // pred_fallthru
        _
      %p1772 = scmp.le.s32.totalorder 2, %s18
      // Predicated region
      $region61: #{tpu_custom_call.1} parent=5 // pred_check
        %p1773 = pneg %p1772
      $region62: #{tpu_custom_call.1} parent=5 // pred_check_branch
        %1775 = sbr.rel (%p1773) target = $region64
      $region63: #{tpu_custom_call.1} parent=5 // pred_region
        %s1776 = ssub.s32 %s18, 2
      $region64: #{tpu_custom_call.1} parent=5 // pred_fallthru
        _
    $region6: #{tpu_custom_call.1} parent=1 // loop_footer
      %s22 = sadd.s32 1, %s18
    $region7: #{tpu_custom_call.1} parent=1 // loop_footer_branch
      %17 = sbr.rel target = $region3
    $region8: #{tpu_custom_call.1} parent=1 // loop_exit
      _
    %1777 = vsyncpa [#allocation4], 1
    %s1778 = scalar_lea.sflag [#allocation4], 1
    %1779 = vsyncpa %s1778, 1
    %1780 = vsyncpa [#allocation7], 1
    %s1781 = scalar_lea.sflag [#allocation7], 1
    %1782 = vsyncpa %s1781, 1
    %1783 = vsyncpa [#allocation5], 1
    %s1784 = scalar_lea.sflag [#allocation5], 1
    %1785 = vsyncpa %s1784, 1
    %1786 = vsyncpa [#allocation10], 1

</llo_original>
